<compile_context>
chip_gen: v6e
topology: v6e:2x2x1
jax: 0.10.0
libtpu: 0.0.40
codegen_flags: <defaults>
</compile_context>

<pallas_src>
import math

import jax
import jax.numpy as jnp
from jax.experimental import pallas as pl
from jax.experimental.pallas import tpu as pltpu


def _round_up(x, m):
    return ((x + m - 1) // m) * m


def _notears_kernel(x_ref, *rest):
    """rest = (w1t_ref, lc_block_refs..., out_ref); everything lane-dense."""
    w_refs = rest[:-1]
    out_ref = rest[-1]

    x = x_ref[...]                                      # [tile_n, d] f32
    # fc1: h = x @ fc1.weight.T, transpose folded into the resident weight.
    h = jnp.dot(x.astype(w_refs[0].dtype), w_refs[0][...],
                preferred_element_type=jnp.float32)     # [tile_n, w0] f32
    for w_ref in w_refs[1:]:
        # sigmoid(h) = 0.5*(tanh(h/2)+1): single EUP tanh + VPU fma, in f32.
        h = 0.5 * (jnp.tanh(0.5 * h) + 1.0)
        h = jnp.dot(h.astype(w_ref.dtype), w_ref[...],
                    preferred_element_type=jnp.float32)
    out_ref[...] = h.astype(out_ref.dtype)              # unmasked lane-dense store


def _block_diag(w):
    """[d, m_in, m_out] per-node weights -> [d*m_in, d*m_out] block-diagonal."""
    d, m_in, m_out = w.shape
    eye = jnp.eye(d, dtype=w.dtype)
    return jnp.einsum('jk,jab->jakb', eye, w).reshape(d * m_in, d * m_out)


def prepare_notears_params(fc1_weight, lc_weights, d, hidden_dims,
                           compute_dtype=jnp.bfloat16):
    """Fold / pad / cast the torch-layout weights once.

    Cache (or jit) the result: this is O(d^2 * m) work that must not be redone
    on every forward call inside a training loop.
    """
    # Lane-dense (multiple-of-128) width of every layer's activation.
    widths = [_round_up(d * m, 128) for m in hidden_dims]   # hidden_dims[-1]==1

    # fc1: nn.Linear weight [d*m1, d] -> transpose -> [d, d*m1] -> pad columns.
    w1t = fc1_weight.T
    w1t = jnp.pad(w1t, ((0, 0), (0, widths[0] - d * hidden_dims[0])))
    mats = [w1t.astype(compute_dtype)]

    # LocallyConnected layers: fold into block-diagonal dense matrices and pad
    # both dims to the lane-dense widths.  Zero-padded activation lanes pass
    # through sigmoid as 0.5 but hit all-zero weight rows, contributing 0.
    for i, w in enumerate(lc_weights):
        blk = _block_diag(w)                                # [d*m_in, d*m_out]
        in_w, out_w = blk.shape
        blk = jnp.pad(blk, ((0, widths[i] - in_w), (0, widths[i + 1] - out_w)))
        mats.append(blk.astype(compute_dtype))
    return tuple(mats)


def notears_mlp_forward(x, mats, tile_n=512):
    """x: [n, d] f32; mats: output of prepare_notears_params. Returns [n, d]."""
    n, d = x.shape
    d_pad = mats[-1].shape[1]

    # Batch tile: big (HBM/overhead-bound for small d), multiple of 8
    # sublanes, clamped so the grid has at least 2 steps (megacore / 2 TCs).
    tile_n = max(8, min(_round_up(tile_n, 8),
                        _round_up(pl.cdiv(n, 2), 8),
                        _round_up(n, 8)))
    grid = (pl.cdiv(n, tile_n),)

    weight_bytes = sum(m.size * m.dtype.itemsize for m in mats)
    act_w = max(m.shape[1] for m in mats)
    needed = (weight_bytes                       # resident weights
              + 2 * tile_n * d * 4               # x tile, double-buffered
              + 2 * tile_n * d_pad * 4           # out tile, double-buffered
              + 4 * tile_n * act_w * 4)          # in-kernel activation temps
    vmem_limit = int(min(64 << 20, max(32 << 20, 2 * needed)))

    # Advisory cost estimate (scheduling hint; reflects the padded dense math).
    flops = 2.0 * n * d * mats[0].shape[1]
    transcendentals = 0.0
    for m in mats[1:]:
        transcendentals += n * m.shape[0]
        flops += 2.0 * n * m.shape[0] * m.shape[1]
    bytes_accessed = x.size * x.dtype.itemsize + weight_bytes + n * d_pad * 4

    def build(weight_mode):
        wkw = {} if weight_mode is None else {"pipeline_mode": weight_mode}
        in_specs = [pl.BlockSpec((tile_n, d), lambda i: (i, 0))]      # x: batch tiled
        in_specs += [pl.BlockSpec(m.shape, lambda i: (0, 0), **wkw)   # weights resident
                     for m in mats]
        return pl.pallas_call(
            _notears_kernel,
            grid=grid,
            in_specs=in_specs,
            out_specs=pl.BlockSpec((tile_n, d_pad), lambda i: (i, 0)),  # lane-dense
            out_shape=jax.ShapeDtypeStruct((n, d_pad), jnp.float32),
            compiler_params=pltpu.CompilerParams(
                dimension_semantics=("parallel",),
                vmem_limit_bytes=vmem_limit),
            cost_estimate=pl.CostEstimate(
                flops=int(flops),
                transcendentals=int(transcendentals),
                bytes_accessed=int(bytes_accessed)),
        )

    try:
        # Constant-index resident weights: one VMEM buffer each is enough.
        out_pad = build(pl.Buffered(1))(x, *mats)
    except Exception:
        # Fallback if this Pallas build rejects buffer_count=1.
        out_pad = build(None)(x, *mats)

    return out_pad[:, :d]


def notears_mlp_ref(x, fc1_weight, lc_weights, d, hidden_dims):
    """Pure-JAX reference with the exact torch semantics."""
    h = x @ fc1_weight.T                              # [n, d*m1]
    h = h.reshape(-1, d, hidden_dims[0])              # [n, d, m1]
    for w in lc_weights:
        h = jax.nn.sigmoid(h)
        h = jnp.einsum('ndi,dio->ndo', h, w)          # per-node matmul
    return h[..., 0]                                  # squeeze(dim=2)


if __name__ == "__main__":
    def run_case(d, hidden_dims, n, key):
        keys = jax.random.split(key, 2 + len(hidden_dims) - 1)
        x = jax.random.normal(keys[0], (n, d), dtype=jnp.float32)

        # fc1 = nn.Linear(d, d*m1, bias=False): weight [d*m1, d]
        b1 = 1.0 / math.sqrt(d)
        fc1_weight = jax.random.uniform(
            keys[1], (d * hidden_dims[0], d), minval=-b1, maxval=b1,
            dtype=jnp.float32)

        # LocallyConnected weights: [d, m_in, m_out]
        lc_weights = []
        for i in range(len(hidden_dims) - 1):
            m_in, m_out = hidden_dims[i], hidden_dims[i + 1]
            bd = math.sqrt(1.0 / m_in)
            lc_weights.append(jax.random.uniform(
                keys[2 + i], (d, m_in, m_out), minval=-bd, maxval=bd,
                dtype=jnp.float32))

        ref = notears_mlp_ref(x, fc1_weight, lc_weights, d, hidden_dims)

        # f32 path: tight agreement with the reference.
        mats32 = prepare_notears_params(fc1_weight, lc_weights, d, hidden_dims,
                                        compute_dtype=jnp.float32)
        out32 = jax.block_until_ready(notears_mlp_forward(x, mats32))
        assert out32.shape == (n, d)
        assert jnp.allclose(out32, ref, atol=1e-4, rtol=1e-4), \
            f"f32 mismatch vs reference (d={d}, hidden_dims={hidden_dims})"

        # bf16 fast path (f32 accumulation): looser tolerance.
        mats16 = prepare_notears_params(fc1_weight, lc_weights, d, hidden_dims,
                                        compute_dtype=jnp.bfloat16)
        out16 = jax.block_until_ready(notears_mlp_forward(x, mats16))
        assert out16.shape == (n, d)
        assert jnp.allclose(out16, ref, atol=5e-2, rtol=5e-2), \
            f"bf16 mismatch vs reference (d={d}, hidden_dims={hidden_dims})"

    key = jax.random.PRNGKey(0)
    k1, k2 = jax.random.split(key)

    # Standard NOTEARS-MLP config: single LocallyConnected layer, m_out = 1.
    run_case(d=8, hidden_dims=[16, 1], n=512, key=k1)
    # Deeper variant exercising the padded intermediate-layer path.
    run_case(d=8, hidden_dims=[16, 8, 1], n=512, key=k2)

    print("KERNEL_OK")
</pallas_src>

<mosaic_0001>
module attributes {stable_mosaic.version = 11 : i64} {
  func.func @_notears_kernel(%arg0: i32, %arg1: memref<256x8xf32, #tpu.memory_space<vmem>>, %arg2: memref<8x128xf32, #tpu.memory_space<vmem>>, %arg3: memref<128x128xf32, #tpu.memory_space<vmem>>, %arg4: memref<256x128xf32, #tpu.memory_space<vmem>>) attributes {dimension_semantics = [#tpu.dimension_semantics<parallel>], iteration_bounds = array<i64: 2>, scalar_prefetch = 0 : i64, scratch_operands = 0 : i64, tpu.core_type = #tpu.core_type<tc>, window_params = [{transform_indices = @transform_0, window_bounds = array<i64: 256, 8>}, {pipeline_mode = #tpu.pipeline_mode<synchronous>, transform_indices = @transform_1, window_bounds = array<i64: 8, 128>}, {pipeline_mode = #tpu.pipeline_mode<synchronous>, transform_indices = @transform_2, window_bounds = array<i64: 128, 128>}, {transform_indices = @transform_3, window_bounds = array<i64: 256, 128>}]} {
    %c0 = arith.constant 0 : index
    %c0_0 = arith.constant 0 : index
    %0 = vector.load %arg1[%c0, %c0_0] : memref<256x8xf32, #tpu.memory_space<vmem>>, vector<256x8xf32>
    %c0_1 = arith.constant 0 : index
    %c0_2 = arith.constant 0 : index
    %1 = vector.load %arg2[%c0_1, %c0_2] : memref<8x128xf32, #tpu.memory_space<vmem>>, vector<8x128xf32>
    %cst = arith.constant dense<0.000000e+00> : vector<256x128xf32>
    %2 = tpu.matmul %0, %1, %cst {dimension_numbers = #tpu.dot_dimension_numbers<[1], [0], [0], [1], [0, 0, 1, 1], [], []>} : vector<256x8xf32>, vector<8x128xf32>, vector<256x128xf32> -> vector<256x128xf32>
    %cst_3 = arith.constant 5.000000e-01 : f32
    %3 = vector.broadcast %cst_3 : f32 to vector<256x128xf32>
    %4 = arith.mulf %3, %2 : vector<256x128xf32>
    %5 = math.tanh %4 : vector<256x128xf32>
    %cst_4 = arith.constant 1.000000e+00 : f32
    %6 = vector.broadcast %cst_4 : f32 to vector<256x128xf32>
    %7 = arith.addf %5, %6 : vector<256x128xf32>
    %cst_5 = arith.constant 5.000000e-01 : f32
    %8 = vector.broadcast %cst_5 : f32 to vector<256x128xf32>
    %9 = arith.mulf %8, %7 : vector<256x128xf32>
    %c0_6 = arith.constant 0 : index
    %c0_7 = arith.constant 0 : index
    %10 = vector.load %arg3[%c0_6, %c0_7] : memref<128x128xf32, #tpu.memory_space<vmem>>, vector<128x128xf32>
    %cst_8 = arith.constant dense<0.000000e+00> : vector<256x128xf32>
    %11 = tpu.matmul %9, %10, %cst_8 {dimension_numbers = #tpu.dot_dimension_numbers<[1], [0], [0], [1], [0, 0, 1, 1], [], []>} : vector<256x128xf32>, vector<128x128xf32>, vector<256x128xf32> -> vector<256x128xf32>
    %c0_9 = arith.constant 0 : index
    %c0_10 = arith.constant 0 : index
    %12 = vector.load %arg4[%c0_9, %c0_10] : memref<256x128xf32, #tpu.memory_space<vmem>>, vector<256x128xf32>
    tpu.vector_store %arg4[%c0_9, %c0_10], %11 {strides = array<i32>} : memref<256x128xf32, #tpu.memory_space<vmem>>, vector<256x128xf32>,
    return
  }
  func.func @transform_0(%arg0: i32) -> (i32, i32) {
    %c0_i32 = arith.constant 0 : i32
    %c0_i32_0 = arith.constant 0 : i32
    return %arg0, %c0_i32 : i32, i32
  }
  func.func @transform_1(%arg0: i32) -> (i32, i32) {
    %c0_i32 = arith.constant 0 : i32
    %c0_i32_0 = arith.constant 0 : i32
    %c0_i32_1 = arith.constant 0 : i32
    return %c0_i32, %c0_i32_0 : i32, i32
  }
  func.func @transform_2(%arg0: i32) -> (i32, i32) {
    %c0_i32 = arith.constant 0 : i32
    %c0_i32_0 = arith.constant 0 : i32
    %c0_i32_1 = arith.constant 0 : i32
    return %c0_i32, %c0_i32_0 : i32, i32
  }
  func.func @transform_3(%arg0: i32) -> (i32, i32) {
    %c0_i32 = arith.constant 0 : i32
    %c0_i32_0 = arith.constant 0 : i32
    return %arg0, %c0_i32 : i32, i32
  }
}

module attributes {stable_mosaic.version = 11 : i64} {
  func.func @_notears_kernel(%arg0: i32, %arg1: memref<256x8xf32, #tpu.memory_space<vmem>>, %arg2: memref<8x128xf32, #tpu.memory_space<vmem>>, %arg3: memref<128x128xf32, #tpu.memory_space<vmem>>, %arg4: memref<256x128xf32, #tpu.memory_space<vmem>>) attributes {dimension_semantics = [#tpu.dimension_semantics<parallel>], iteration_bounds = array<i64: 2>, scalar_prefetch = 0 : i64, scratch_operands = 0 : i64, tpu.core_type = #tpu.core_type<tc>, window_params = [{transform_indices = @transform_0, window_bounds = array<i64: 256, 8>}, {pipeline_mode = #tpu.pipeline_mode<synchronous>, transform_indices = @transform_1, window_bounds = array<i64: 8, 128>}, {pipeline_mode = #tpu.pipeline_mode<synchronous>, transform_indices = @transform_2, window_bounds = array<i64: 128, 128>}, {transform_indices = @transform_3, window_bounds = array<i64: 256, 128>}]} {
    %c0 = arith.constant 0 : index
    %c0_0 = arith.constant 0 : index
    %0 = vector.load %arg1[%c0, %c0_0] : memref<256x8xf32, #tpu.memory_space<vmem>>, vector<256x8xf32>
    %c0_1 = arith.constant 0 : index
    %c0_2 = arith.constant 0 : index
    %1 = vector.load %arg2[%c0_1, %c0_2] : memref<8x128xf32, #tpu.memory_space<vmem>>, vector<8x128xf32>
    %cst = arith.constant dense<0.000000e+00> : vector<256x128xf32>
    %2 = tpu.matmul %0, %1, %cst {dimension_numbers = #tpu.dot_dimension_numbers<[1], [0], [0], [1], [0, 0, 1, 1], [], []>} : vector<256x8xf32>, vector<8x128xf32>, vector<256x128xf32> -> vector<256x128xf32>
    %cst_3 = arith.constant 5.000000e-01 : f32
    %3 = vector.broadcast %cst_3 : f32 to vector<256x128xf32>
    %4 = arith.mulf %3, %2 : vector<256x128xf32>
    %5 = math.tanh %4 : vector<256x128xf32>
    %cst_4 = arith.constant 1.000000e+00 : f32
    %6 = vector.broadcast %cst_4 : f32 to vector<256x128xf32>
    %7 = arith.addf %5, %6 : vector<256x128xf32>
    %cst_5 = arith.constant 5.000000e-01 : f32
    %8 = vector.broadcast %cst_5 : f32 to vector<256x128xf32>
    %9 = arith.mulf %8, %7 : vector<256x128xf32>
    %c0_6 = arith.constant 0 : index
    %c0_7 = arith.constant 0 : index
    %10 = vector.load %arg3[%c0_6, %c0_7] : memref<128x128xf32, #tpu.memory_space<vmem>>, vector<128x128xf32>
    %cst_8 = arith.constant dense<0.000000e+00> : vector<256x128xf32>
    %11 = tpu.matmul %9, %10, %cst_8 {dimension_numbers = #tpu.dot_dimension_numbers<[1], [0], [0], [1], [0, 0, 1, 1], [], []>} : vector<256x128xf32>, vector<128x128xf32>, vector<256x128xf32> -> vector<256x128xf32>
    %c0_9 = arith.constant 0 : index
    %c0_10 = arith.constant 0 : index
    %12 = vector.load %arg4[%c0_9, %c0_10] : memref<256x128xf32, #tpu.memory_space<vmem>>, vector<256x128xf32>
    tpu.vector_store %arg4[%c0_9, %c0_10], %11 {strides = array<i32>} : memref<256x128xf32, #tpu.memory_space<vmem>>, vector<256x128xf32>,
    return
  }
  func.func @transform_0(%arg0: i32) -> (i32, i32) {
    %c0_i32 = arith.constant 0 : i32
    %c0_i32_0 = arith.constant 0 : i32
    return %arg0, %c0_i32 : i32, i32
  }
  func.func @transform_1(%arg0: i32) -> (i32, i32) {
    %c0_i32 = arith.constant 0 : i32
    %c0_i32_0 = arith.constant 0 : i32
    %c0_i32_1 = arith.constant 0 : i32
    return %c0_i32, %c0_i32_0 : i32, i32
  }
  func.func @transform_2(%arg0: i32) -> (i32, i32) {
    %c0_i32 = arith.constant 0 : i32
    %c0_i32_0 = arith.constant 0 : i32
    %c0_i32_1 = arith.constant 0 : i32
    return %c0_i32, %c0_i32_0 : i32, i32
  }
  func.func @transform_3(%arg0: i32) -> (i32, i32) {
    %c0_i32 = arith.constant 0 : i32
    %c0_i32_0 = arith.constant 0 : i32
    return %arg0, %c0_i32 : i32, i32
  }
}

</mosaic_0001>

<llo_original>
// kernel: tpu_custom_call.1
$region0: #{tpu_custom_call.1}
  #allocation0 [shape = 'u32[]', space=smem, size = 0x4, offset = 0x4, fixed_abs, tag = 'smem constant byte address 0x4 - core index']
  #allocation1 [shape = 'u32[144,128]{1,0:T(1,128)}', space=vmem, size = 0x12000, scoped, tag = 'internal scratch']
  %s0 = inlined_call_operand.vmem [shape: f32[512,8], index: 0, kind: input, shape index: {}]
  %s1 = inlined_call_operand.vmem [shape: f32[8,128], index: 1, kind: input, shape index: {}]
  %s2 = inlined_call_operand.vmem [shape: f32[128,128], index: 2, kind: input, shape index: {}]
  %s3 = inlined_call_operand.hbm [shape: f32[512,128], index: 3, kind: output, shape index: {}]
  %s4 = sld [smem:[#allocation0]]
  $region45: #{tpu_custom_call.1} parent=0
    _
  %s6 = ssub.s32 1, %s4
  %s7 = scalar_select 0, %s6, %s4
  $region1: #{tpu_custom_call.1} parent=0
    #allocation2 [shape = 'u8[262144]{0}', space=vmem, size = 0x40000, scoped, tag = 'output window, operand 0']
    #allocation3 [shape = 's32[2]{0}', space=sflag, size = 0x8, scoped, tag = 'scoped memory for tpu_custom_call.1']
    %8 = vsyncpa [#allocation3], 0
    %s9 = scalar_lea.sflag [#allocation3], 1
    %10 = vsyncpa %s9, 0
    loop: start=0, step=1, limit=4
    $region2: #{tpu_custom_call.1} parent=1 // loop_pre_header
      _
    $region3: #{tpu_custom_call.1} parent=1 // loop_header
      %s12 = sphi 0, %s16
      %p13 = scmp.ge.s32.totalorder %s12, 4
      %s22 = sphi 0, %s24
      %s25 = sphi 0, %s22
      %s26 = sphi 0, %s25
      %s42 = sphi 0, %s26
      %s46 = sphi 0, %s46
      %s48 = sphi 0, %s46
      %s49 = sphi 0, %s48
      %s63 = sphi 0, %s49
      %s67 = sphi 0, %s67
      %s69 = sphi 0, %s67
      %s70 = sphi 0, %s69
      %s84 = sphi 0, %s70
      %s90 = sphi 0, %s92
      %s93 = sphi 0, %s90
      %s94 = sphi 0, %s93
      %s110 = sphi 0, %s94
    $region4: #{tpu_custom_call.1} parent=1 // loop_header_branch
      %15 = sbr.rel (%p13) target = $region8
    $region5: #{tpu_custom_call.1} parent=1 // loop_body
      %s17 = ssub.s32 %s12, 1
      %s18 = ssub.s32 %s12, 2
      %s19 = sadd.s32 %s12, 1
      %s20 = ssub.s32 %s12, %s19
      %p21 = scmp.eq.s32.totalorder %s20, 0
      %s23 = sadd.s32 %s22, 1
      %s24 = scalar_select %p21, %s22, %s23
      %p27 = pneg %p21
      %p28 = scmp.eq.s32.totalorder %s12, 1
      %p29 = por %p27, %p28
      %p30 = scmp.ne.s32.totalorder %s22, %s25
      %p31 = scmp.eq.s32.totalorder %s12, 0
      %p32 = por %p30, %p31
      %p33 = scmp.ne.s32.totalorder %s22, %s25
      %p34 = scmp.eq.s32.totalorder %s17, 1
      %p35 = por %p33, %p34
      %p36 = scmp.ne.s32.totalorder %s25, %s26
      %p37 = scmp.eq.s32.totalorder %s17, 0
      %p38 = por %p36, %p37
      %p39 = scmp.ne.s32.totalorder %s25, %s26
      %p40 = scmp.eq.s32.totalorder %s18, 1
      %p41 = por %p39, %p40
      %p43 = scmp.ne.s32.totalorder %s26, %s42
      %p44 = scmp.eq.s32.totalorder %s18, 0
      %p45 = por %p43, %p44
      %s47 = sadd.s32 %s46, 1
      %p50 = scmp.eq.s32.totalorder %s12, 1
      %p51 = scmp.ne.s32.totalorder %s46, %s48
      %p52 = scmp.eq.s32.totalorder %s12, 0
      %p53 = por %p51, %p52
      %p54 = scmp.ne.s32.totalorder %s46, %s48
      %p55 = scmp.eq.s32.totalorder %s17, 1
      %p56 = por %p54, %p55
      %p57 = scmp.ne.s32.totalorder %s48, %s49
      %p58 = scmp.eq.s32.totalorder %s17, 0
      %p59 = por %p57, %p58
      %p60 = scmp.ne.s32.totalorder %s48, %s49
      %p61 = scmp.eq.s32.totalorder %s18, 1
      %p62 = por %p60, %p61
      %p64 = scmp.ne.s32.totalorder %s49, %s63
      %p65 = scmp.eq.s32.totalorder %s18, 0
      %p66 = por %p64, %p65
      %s68 = sadd.s32 %s67, 1
      %p71 = scmp.eq.s32.totalorder %s12, 1
      %p72 = scmp.ne.s32.totalorder %s67, %s69
      %p73 = scmp.eq.s32.totalorder %s12, 0
      %p74 = por %p72, %p73
      %p75 = scmp.ne.s32.totalorder %s67, %s69
      %p76 = scmp.eq.s32.totalorder %s17, 1
      %p77 = por %p75, %p76
      %p78 = scmp.ne.s32.totalorder %s69, %s70
      %p79 = scmp.eq.s32.totalorder %s17, 0
      %p80 = por %p78, %p79
      %p81 = scmp.ne.s32.totalorder %s69, %s70
      %p82 = scmp.eq.s32.totalorder %s18, 1
      %p83 = por %p81, %p82
      %p85 = scmp.ne.s32.totalorder %s70, %s84
      %p86 = scmp.eq.s32.totalorder %s18, 0
      %p87 = por %p85, %p86
      %s88 = ssub.s32 %s12, %s19
      %p89 = scmp.eq.s32.totalorder %s88, 0
      %s91 = sadd.s32 %s90, 1
      %s92 = scalar_select %p89, %s90, %s91
      %p95 = pneg %p89
      %p96 = scmp.eq.s32.totalorder %s12, 1
      %p97 = por %p95, %p96
      %p98 = scmp.ne.s32.totalorder %s90, %s93
      %p99 = scmp.eq.s32.totalorder %s12, 0
      %p100 = por %p98, %p99
      %p101 = scmp.ne.s32.totalorder %s90, %s93
      %p102 = scmp.eq.s32.totalorder %s17, 1
      %p103 = por %p101, %p102
      %p104 = scmp.ne.s32.totalorder %s93, %s94
      %p105 = scmp.eq.s32.totalorder %s17, 0
      %p106 = por %p104, %p105
      %p107 = scmp.ne.s32.totalorder %s93, %s94
      %p108 = scmp.eq.s32.totalorder %s18, 1
      %p109 = por %p107, %p108
      %p111 = scmp.ne.s32.totalorder %s94, %s110
      %p112 = scmp.eq.s32.totalorder %s18, 0
      %p113 = por %p111, %p112
      %p114 = scmp.le.s32.totalorder 1, %s12
      %p115 = scmp.lt.s32.totalorder %s12, 3
      %p116 = pnand %p114, %p115
      %p117 = pneg %p116
      // Predicated region
      $region9: #{tpu_custom_call.1} parent=5 // pred_check
        _
      $region10: #{tpu_custom_call.1} parent=5 // pred_check_branch
        %119 = sbr.rel (%p116) target = $region12
      $region11: #{tpu_custom_call.1} parent=5 // pred_region
        %s120 = ssub.s32 %s12, 1
        // Predicated region
        $region13: #{tpu_custom_call.1} parent=11 // pred_check
          %p121 = pneg %p59
        $region14: #{tpu_custom_call.1} parent=11 // pred_check_branch
          %123 = sbr.rel (%p121) target = $region16
        $region15: #{tpu_custom_call.1} parent=11 // pred_region
          _
        $region16: #{tpu_custom_call.1} parent=11 // pred_fallthru
          _
        // Predicated region
        $region17: #{tpu_custom_call.1} parent=11 // pred_check
          %p124 = pneg %p80
        $region18: #{tpu_custom_call.1} parent=11 // pred_check_branch
          %126 = sbr.rel (%p124) target = $region20
        $region19: #{tpu_custom_call.1} parent=11 // pred_region
          _
        $region20: #{tpu_custom_call.1} parent=11 // pred_fallthru
          _
      $region12: #{tpu_custom_call.1} parent=5 // pred_fallthru
        _
      %p127 = scmp.lt.s32.totalorder %s12, 2
      // Predicated region
      $region21: #{tpu_custom_call.1} parent=5 // pred_check
        %p128 = pneg %p127
      $region22: #{tpu_custom_call.1} parent=5 // pred_check_branch
        %130 = sbr.rel (%p128) target = $region24
      $region23: #{tpu_custom_call.1} parent=5 // pred_region
        // Predicated region
        $region25: #{tpu_custom_call.1} parent=23 // pred_check
          %p131 = pneg %p32
        $region26: #{tpu_custom_call.1} parent=23 // pred_check_branch
          %133 = sbr.rel (%p131) target = $region28
        $region27: #{tpu_custom_call.1} parent=23 // pred_region
          %s134 = smul.u32 32, %s12
          %p135 = scmp.lt.s32.totalorder %s134, 63
          %s136 = scalar_select %p135, %s134, 63
          %s137 = smul.addr %s136, 8
          %s138 = scalar_lea.vmem %s0, %s137
          %s139 = smul.u32 32, %s12
        $region28: #{tpu_custom_call.1} parent=23 // pred_fallthru
          _
      $region24: #{tpu_custom_call.1} parent=5 // pred_fallthru
        _
      %p140 = scmp.le.s32.totalorder 1, %s12
      %p141 = scmp.lt.s32.totalorder %s12, 3
      %p142 = pnand %p140, %p141
      %p143 = pneg %p142
      // Predicated region
      $region29: #{tpu_custom_call.1} parent=5 // pred_check
        _
      $region30: #{tpu_custom_call.1} parent=5 // pred_check_branch
        %145 = sbr.rel (%p142) target = $region32
      $region31: #{tpu_custom_call.1} parent=5 // pred_region
        %s146 = ssub.s32 %s12, 1
        %s147 = smul.u32 32, %s17
        %p148 = scmp.lt.s32.totalorder %s147, 63
        %s149 = scalar_select %p148, %s147, 63
        %s150 = smul.addr %s149, 8
        %s151 = scalar_lea.vmem %s0, %s150
        %p152 = pneg %p38
        %p153 = pneg %p35
        %p154 = pneg %p59
        %p155 = pneg %p56
        %p156 = pneg %p80
        %p157 = pneg %p77
        %p158 = pneg %p106
        %p159 = pneg %p103
        %s160 = sand.u32 %s93, 1
        %s161 = scalar_lea.sflag [#allocation3], %s160
        %s162 = sand.u32 %s93, 1
        %s163 = smul.addr %s162, 256
        %s164 = scalar_lea.vmem [#allocation2], %s163
        %s165 = smul.u32 32, %s17
        %p166 = scmp.lt.s32.totalorder %s165, 63
        %s167 = scalar_select %p166, %s165, 63
        %s168 = smul.addr %s167, 8
        %s169 = scalar_lea.vmem %s0, %s168
        %s170 = smul.u32 32, %s17
        %s171 = smul.u32 32, %s17
        %v172 = vld [vmem:[%s169] sm:$0xff]
        %v173 = vld [vmem:[%s169 + $0x8] sm:$0xff]
        %v174 = vld [vmem:[%s169 + $0x10] sm:$0xff]
        %v175 = vld [vmem:[%s169 + $0x18] sm:$0xff]
        %v176 = vld [vmem:[%s169 + $0x20] sm:$0xff]
        %v177 = vld [vmem:[%s169 + $0x28] sm:$0xff]
        %v178 = vld [vmem:[%s169 + $0x30] sm:$0xff]
        %v179 = vld [vmem:[%s169 + $0x38] sm:$0xff]
        %v180 = vld [vmem:[%s169 + $0x40] sm:$0xff]
        %v181 = vld [vmem:[%s169 + $0x48] sm:$0xff]
        %v182 = vld [vmem:[%s169 + $0x50] sm:$0xff]
        %v183 = vld [vmem:[%s169 + $0x58] sm:$0xff]
        %v184 = vld [vmem:[%s169 + $0x60] sm:$0xff]
        %v185 = vld [vmem:[%s169 + $0x68] sm:$0xff]
        %v186 = vld [vmem:[%s169 + $0x70] sm:$0xff]
        %v187 = vld [vmem:[%s169 + $0x78] sm:$0xff]
        %v188 = vld [vmem:[%s169 + $0x80] sm:$0xff]
        %v189 = vld [vmem:[%s169 + $0x88] sm:$0xff]
        %v190 = vld [vmem:[%s169 + $0x90] sm:$0xff]
        %v191 = vld [vmem:[%s169 + $0x98] sm:$0xff]
        %v192 = vld [vmem:[%s169 + $0xa0] sm:$0xff]
        %v193 = vld [vmem:[%s169 + $0xa8] sm:$0xff]
        %v194 = vld [vmem:[%s169 + $0xb0] sm:$0xff]
        %v195 = vld [vmem:[%s169 + $0xb8] sm:$0xff]
        %v196 = vld [vmem:[%s169 + $0xc0] sm:$0xff]
        %v197 = vld [vmem:[%s169 + $0xc8] sm:$0xff]
        %v198 = vld [vmem:[%s169 + $0xd0] sm:$0xff]
        %v199 = vld [vmem:[%s169 + $0xd8] sm:$0xff]
        %v200 = vld [vmem:[%s169 + $0xe0] sm:$0xff]
        %v201 = vld [vmem:[%s169 + $0xe8] sm:$0xff]
        %v202 = vld [vmem:[%s169 + $0xf0] sm:$0xff]
        %v203 = vld [vmem:[%s169 + $0xf8] sm:$0xff]
        %v204 = vld [vmem:[%s1] sm:$0xff]
        %vm205 = vcmask 64512
        %v207 = vsel %vm205, %v172, 0
        %v210 = vsel %vm205, %v173, 0
        %v213 = vsel %vm205, %v174, 0
        %v216 = vsel %vm205, %v175, 0
        %v219 = vsel %vm205, %v176, 0
        %v222 = vsel %vm205, %v177, 0
        %v225 = vsel %vm205, %v178, 0
        %v228 = vsel %vm205, %v179, 0
        %v231 = vsel %vm205, %v180, 0
        %v234 = vsel %vm205, %v181, 0
        %v237 = vsel %vm205, %v182, 0
        %v240 = vsel %vm205, %v183, 0
        %v243 = vsel %vm205, %v184, 0
        %v246 = vsel %vm205, %v185, 0
        %v249 = vsel %vm205, %v186, 0
        %v252 = vsel %vm205, %v187, 0
        %v255 = vsel %vm205, %v188, 0
        %v258 = vsel %vm205, %v189, 0
        %v261 = vsel %vm205, %v190, 0
        %v264 = vsel %vm205, %v191, 0
        %v267 = vsel %vm205, %v192, 0
        %v270 = vsel %vm205, %v193, 0
        %v273 = vsel %vm205, %v194, 0
        %v276 = vsel %vm205, %v195, 0
        %v279 = vsel %vm205, %v196, 0
        %v282 = vsel %vm205, %v197, 0
        %v285 = vsel %vm205, %v198, 0
        %v288 = vsel %vm205, %v199, 0
        %v291 = vsel %vm205, %v200, 0
        %v294 = vsel %vm205, %v201, 0
        %v297 = vsel %vm205, %v202, 0
        %v300 = vsel %vm205, %v203, 0
        %302 = vmatprep.subr.mxu0 0.0
        %303 = vmatpush1.msra.mxu0 0.0
        %304 = vmatprep.subr.mxu0 0.0
        %305 = vmatpush1.msra.mxu0 0.0
        %306 = vmatprep.subr.mxu0 0.0
        %307 = vmatpush1.msra.mxu0 0.0
        %308 = vmatprep.subr.mxu0 0.0
        %309 = vmatpush1.msra.mxu0 0.0
        %310 = vmatprep.subr.mxu0 0.0
        %311 = vmatpush1.msra.mxu0 0.0
        %312 = vmatprep.subr.mxu0 0.0
        %313 = vmatpush1.msra.mxu0 0.0
        %314 = vmatprep.subr.mxu0 0.0
        %315 = vmatpush1.msra.mxu0 0.0
        %316 = vmatprep.subr.mxu0 0.0
        %317 = vmatpush1.msra.mxu0 0.0
        %318 = vmatprep.subr.mxu0 0.0
        %319 = vmatpush1.msra.mxu0 0.0
        %320 = vmatprep.subr.mxu0 0.0
        %321 = vmatpush1.msra.mxu0 0.0
        %322 = vmatprep.subr.mxu0 0.0
        %323 = vmatpush1.msra.mxu0 0.0
        %324 = vmatprep.subr.mxu0 0.0
        %325 = vmatpush1.msra.mxu0 0.0
        %326 = vmatprep.subr.mxu0 0.0
        %327 = vmatpush1.msra.mxu0 0.0
        %328 = vmatprep.subr.mxu0 0.0
        %329 = vmatpush1.msra.mxu0 0.0
        %330 = vmatprep.subr.mxu0 0.0
        %331 = vmatpush1.msra.mxu0 0.0
        %332 = vmatprep.subr.mxu0 0.0
        %333 = vmatpush1.msra.mxu0 %v204
        %334 = vmatprep.subr.mxu0 0.0
        %335 = vmatpush2.msra.mxu0 0.0
        %336 = vmatprep.subr.mxu0 0.0
        %337 = vmatpush2.msra.mxu0 0.0
        %338 = vmatprep.subr.mxu0 0.0
        %339 = vmatpush2.msra.mxu0 0.0
        %340 = vmatprep.subr.mxu0 0.0
        %341 = vmatpush2.msra.mxu0 0.0
        %342 = vmatprep.subr.mxu0 0.0
        %343 = vmatpush2.msra.mxu0 0.0
        %344 = vmatprep.subr.mxu0 0.0
        %345 = vmatpush2.msra.mxu0 0.0
        %346 = vmatprep.subr.mxu0 0.0
        %347 = vmatpush2.msra.mxu0 0.0
        %348 = vmatprep.subr.mxu0 0.0
        %349 = vmatpush2.msra.mxu0 0.0
        %350 = vmatprep.subr.mxu0 0.0
        %351 = vmatpush2.msra.mxu0 0.0
        %352 = vmatprep.subr.mxu0 0.0
        %353 = vmatpush2.msra.mxu0 0.0
        %354 = vmatprep.subr.mxu0 0.0
        %355 = vmatpush2.msra.mxu0 0.0
        %356 = vmatprep.subr.mxu0 0.0
        %357 = vmatpush2.msra.mxu0 0.0
        %358 = vmatprep.subr.mxu0 0.0
        %359 = vmatpush2.msra.mxu0 0.0
        %360 = vmatprep.subr.mxu0 0.0
        %361 = vmatpush2.msra.mxu0 0.0
        %362 = vmatprep.subr.mxu0 0.0
        %363 = vmatpush2.msra.mxu0 0.0
        %364 = vmatprep.subr.mxu0 0.0
        %365 = vmatpush2.msra.mxu0 0.0
        %366 = vmatprep.mubr.f32.mxu0 0.0
        %367 = vmatmul.mubr.f32.gmra.mxu0 %v207
        %v368 = vpop.f32.mrf.mxu0
        %v369 = vadd.f32 0.0, %v368
        %v370 = vpop.f32.mrf.mxu0
        %371 = vmatprep.mubr.f32.mxu0 0.0
        %372 = vmatmul.mubr.f32.gmra.mxu0 %v210
        %v373 = vpop.f32.mrf.mxu0
        %v374 = vadd.f32 0.0, %v373
        %v375 = vpop.f32.mrf.mxu0
        %376 = vmatprep.mubr.f32.mxu0 0.0
        %377 = vmatmul.mubr.f32.gmra.mxu0 %v213
        %v378 = vpop.f32.mrf.mxu0
        %v379 = vadd.f32 0.0, %v378
        %v380 = vpop.f32.mrf.mxu0
        %381 = vmatprep.mubr.f32.mxu0 0.0
        %382 = vmatmul.mubr.f32.gmra.mxu0 %v216
        %v383 = vpop.f32.mrf.mxu0
        %v384 = vadd.f32 0.0, %v383
        %v385 = vpop.f32.mrf.mxu0
        %386 = vmatprep.mubr.f32.mxu0 0.0
        %387 = vmatmul.mubr.f32.gmra.mxu0 %v219
        %v388 = vpop.f32.mrf.mxu0
        %v389 = vadd.f32 0.0, %v388
        %v390 = vpop.f32.mrf.mxu0
        %391 = vmatprep.mubr.f32.mxu0 0.0
        %392 = vmatmul.mubr.f32.gmra.mxu0 %v222
        %v393 = vpop.f32.mrf.mxu0
        %v394 = vadd.f32 0.0, %v393
        %v395 = vpop.f32.mrf.mxu0
        %396 = vmatprep.mubr.f32.mxu0 0.0
        %397 = vmatmul.mubr.f32.gmra.mxu0 %v225
        %v398 = vpop.f32.mrf.mxu0
        %v399 = vadd.f32 0.0, %v398
        %v400 = vpop.f32.mrf.mxu0
        %401 = vmatprep.mubr.f32.mxu0 0.0
        %402 = vmatmul.mubr.f32.gmra.mxu0 %v228
        %v403 = vpop.f32.mrf.mxu0
        %v404 = vadd.f32 0.0, %v403
        %v405 = vpop.f32.mrf.mxu0
        %406 = vmatprep.mubr.f32.mxu0 0.0
        %407 = vmatmul.mubr.f32.gmra.mxu0 %v231
        %v408 = vpop.f32.mrf.mxu0
        %v409 = vadd.f32 0.0, %v408
        %v410 = vpop.f32.mrf.mxu0
        %411 = vmatprep.mubr.f32.mxu0 0.0
        %412 = vmatmul.mubr.f32.gmra.mxu0 %v234
        %v413 = vpop.f32.mrf.mxu0
        %v414 = vadd.f32 0.0, %v413
        %v415 = vpop.f32.mrf.mxu0
        %416 = vmatprep.mubr.f32.mxu0 0.0
        %417 = vmatmul.mubr.f32.gmra.mxu0 %v237
        %v418 = vpop.f32.mrf.mxu0
        %v419 = vadd.f32 0.0, %v418
        %v420 = vpop.f32.mrf.mxu0
        %421 = vmatprep.mubr.f32.mxu0 0.0
        %422 = vmatmul.mubr.f32.gmra.mxu0 %v240
        %v423 = vpop.f32.mrf.mxu0
        %v424 = vadd.f32 0.0, %v423
        %v425 = vpop.f32.mrf.mxu0
        %426 = vmatprep.mubr.f32.mxu0 0.0
        %427 = vmatmul.mubr.f32.gmra.mxu0 %v243
        %v428 = vpop.f32.mrf.mxu0
        %v429 = vadd.f32 0.0, %v428
        %v430 = vpop.f32.mrf.mxu0
        %431 = vmatprep.mubr.f32.mxu0 0.0
        %432 = vmatmul.mubr.f32.gmra.mxu0 %v246
        %v433 = vpop.f32.mrf.mxu0
        %v434 = vadd.f32 0.0, %v433
        %v435 = vpop.f32.mrf.mxu0
        %436 = vmatprep.mubr.f32.mxu0 0.0
        %437 = vmatmul.mubr.f32.gmra.mxu0 %v249
        %v438 = vpop.f32.mrf.mxu0
        %v439 = vadd.f32 0.0, %v438
        %v440 = vpop.f32.mrf.mxu0
        %441 = vmatprep.mubr.f32.mxu0 0.0
        %442 = vmatmul.mubr.f32.gmra.mxu0 %v252
        %v443 = vpop.f32.mrf.mxu0
        %v444 = vadd.f32 0.0, %v443
        %v445 = vpop.f32.mrf.mxu0
        %446 = vmatprep.mubr.f32.mxu0 0.0
        %447 = vmatmul.mubr.f32.gmra.mxu0 %v255
        %v448 = vpop.f32.mrf.mxu0
        %v449 = vadd.f32 0.0, %v448
        %v450 = vpop.f32.mrf.mxu0
        %451 = vmatprep.mubr.f32.mxu0 0.0
        %452 = vmatmul.mubr.f32.gmra.mxu0 %v258
        %v453 = vpop.f32.mrf.mxu0
        %v454 = vadd.f32 0.0, %v453
        %v455 = vpop.f32.mrf.mxu0
        %456 = vmatprep.mubr.f32.mxu0 0.0
        %457 = vmatmul.mubr.f32.gmra.mxu0 %v261
        %v458 = vpop.f32.mrf.mxu0
        %v459 = vadd.f32 0.0, %v458
        %v460 = vpop.f32.mrf.mxu0
        %461 = vmatprep.mubr.f32.mxu0 0.0
        %462 = vmatmul.mubr.f32.gmra.mxu0 %v264
        %v463 = vpop.f32.mrf.mxu0
        %v464 = vadd.f32 0.0, %v463
        %v465 = vpop.f32.mrf.mxu0
        %466 = vmatprep.mubr.f32.mxu0 0.0
        %467 = vmatmul.mubr.f32.gmra.mxu0 %v267
        %v468 = vpop.f32.mrf.mxu0
        %v469 = vadd.f32 0.0, %v468
        %v470 = vpop.f32.mrf.mxu0
        %471 = vmatprep.mubr.f32.mxu0 0.0
        %472 = vmatmul.mubr.f32.gmra.mxu0 %v270
        %v473 = vpop.f32.mrf.mxu0
        %v474 = vadd.f32 0.0, %v473
        %v475 = vpop.f32.mrf.mxu0
        %476 = vmatprep.mubr.f32.mxu0 0.0
        %477 = vmatmul.mubr.f32.gmra.mxu0 %v273
        %v478 = vpop.f32.mrf.mxu0
        %v479 = vadd.f32 0.0, %v478
        %v480 = vpop.f32.mrf.mxu0
        %481 = vmatprep.mubr.f32.mxu0 0.0
        %482 = vmatmul.mubr.f32.gmra.mxu0 %v276
        %v483 = vpop.f32.mrf.mxu0
        %v484 = vadd.f32 0.0, %v483
        %v485 = vpop.f32.mrf.mxu0
        %486 = vmatprep.mubr.f32.mxu0 0.0
        %487 = vmatmul.mubr.f32.gmra.mxu0 %v279
        %v488 = vpop.f32.mrf.mxu0
        %v489 = vadd.f32 0.0, %v488
        %v490 = vpop.f32.mrf.mxu0
        %491 = vmatprep.mubr.f32.mxu0 0.0
        %492 = vmatmul.mubr.f32.gmra.mxu0 %v282
        %v493 = vpop.f32.mrf.mxu0
        %v494 = vadd.f32 0.0, %v493
        %v495 = vpop.f32.mrf.mxu0
        %496 = vmatprep.mubr.f32.mxu0 0.0
        %497 = vmatmul.mubr.f32.gmra.mxu0 %v285
        %v498 = vpop.f32.mrf.mxu0
        %v499 = vadd.f32 0.0, %v498
        %v500 = vpop.f32.mrf.mxu0
        %501 = vmatprep.mubr.f32.mxu0 0.0
        %502 = vmatmul.mubr.f32.gmra.mxu0 %v288
        %v503 = vpop.f32.mrf.mxu0
        %v504 = vadd.f32 0.0, %v503
        %v505 = vpop.f32.mrf.mxu0
        %506 = vmatprep.mubr.f32.mxu0 0.0
        %507 = vmatmul.mubr.f32.gmra.mxu0 %v291
        %v508 = vpop.f32.mrf.mxu0
        %v509 = vadd.f32 0.0, %v508
        %v510 = vpop.f32.mrf.mxu0
        %511 = vmatprep.mubr.f32.mxu0 0.0
        %512 = vmatmul.mubr.f32.gmra.mxu0 %v294
        %v513 = vpop.f32.mrf.mxu0
        %v514 = vadd.f32 0.0, %v513
        %v515 = vpop.f32.mrf.mxu0
        %516 = vmatprep.mubr.f32.mxu0 0.0
        %517 = vmatmul.mubr.f32.gmra.mxu0 %v297
        %v518 = vpop.f32.mrf.mxu0
        %v519 = vadd.f32 0.0, %v518
        %v520 = vpop.f32.mrf.mxu0
        %521 = vmatprep.mubr.f32.mxu0 0.0
        %522 = vmatmul.mubr.f32.gmra.mxu0 %v300
        %v523 = vpop.f32.mrf.mxu0
        %v524 = vadd.f32 0.0, %v523
        %v525 = vpop.f32.mrf.mxu0
        %526 = vdwg.mxu0
        %v527 = vmul.f32 %v369, 0.5
        %v528 = vmul.f32 %v374, 0.5
        %v529 = vmul.f32 %v379, 0.5
        %v530 = vmul.f32 %v384, 0.5
        %v531 = vmul.f32 %v389, 0.5
        %v532 = vmul.f32 %v394, 0.5
        %v533 = vmul.f32 %v399, 0.5
        %v534 = vmul.f32 %v404, 0.5
        %v535 = vmul.f32 %v409, 0.5
        %v536 = vmul.f32 %v414, 0.5
        %v537 = vmul.f32 %v419, 0.5
        %v538 = vmul.f32 %v424, 0.5
        %v539 = vmul.f32 %v429, 0.5
        %v540 = vmul.f32 %v434, 0.5
        %v541 = vmul.f32 %v439, 0.5
        %v542 = vmul.f32 %v444, 0.5
        %v543 = vmul.f32 %v449, 0.5
        %v544 = vmul.f32 %v454, 0.5
        %v545 = vmul.f32 %v459, 0.5
        %v546 = vmul.f32 %v464, 0.5
        %v547 = vmul.f32 %v469, 0.5
        %v548 = vmul.f32 %v474, 0.5
        %v549 = vmul.f32 %v479, 0.5
        %v550 = vmul.f32 %v484, 0.5
        %v551 = vmul.f32 %v489, 0.5
        %v552 = vmul.f32 %v494, 0.5
        %v553 = vmul.f32 %v499, 0.5
        %v554 = vmul.f32 %v504, 0.5
        %v555 = vmul.f32 %v509, 0.5
        %v556 = vmul.f32 %v514, 0.5
        %v557 = vmul.f32 %v519, 0.5
        %v558 = vmul.f32 %v524, 0.5
        %v559 = vtanh.pop %v527
        %v560 = vtanh.pop %v528
        %v561 = vtanh.pop %v529
        %v562 = vtanh.pop %v530
        %v563 = vtanh.pop %v531
        %v564 = vtanh.pop %v532
        %v565 = vtanh.pop %v533
        %v566 = vtanh.pop %v534
        %v567 = vtanh.pop %v535
        %v568 = vtanh.pop %v536
        %v569 = vtanh.pop %v537
        %v570 = vtanh.pop %v538
        %v571 = vtanh.pop %v539
        %v572 = vtanh.pop %v540
        %v573 = vtanh.pop %v541
        %v574 = vtanh.pop %v542
        %v575 = vtanh.pop %v543
        %v576 = vtanh.pop %v544
        %v577 = vtanh.pop %v545
        %v578 = vtanh.pop %v546
        %v579 = vtanh.pop %v547
        %v580 = vtanh.pop %v548
        %v581 = vtanh.pop %v549
        %v582 = vtanh.pop %v550
        %v583 = vtanh.pop %v551
        %v584 = vtanh.pop %v552
        %v585 = vtanh.pop %v553
        %v586 = vtanh.pop %v554
        %v587 = vtanh.pop %v555
        %v588 = vtanh.pop %v556
        %v589 = vtanh.pop %v557
        %v590 = vtanh.pop %v558
        %v591 = vadd.f32 %v559, 1.0
        %v592 = vadd.f32 %v560, 1.0
        %v593 = vadd.f32 %v561, 1.0
        %v594 = vadd.f32 %v562, 1.0
        %v595 = vadd.f32 %v563, 1.0
        %v596 = vadd.f32 %v564, 1.0
        %v597 = vadd.f32 %v565, 1.0
        %v598 = vadd.f32 %v566, 1.0
        %v599 = vadd.f32 %v567, 1.0
        %v600 = vadd.f32 %v568, 1.0
        %v601 = vadd.f32 %v569, 1.0
        %v602 = vadd.f32 %v570, 1.0
        %v603 = vadd.f32 %v571, 1.0
        %v604 = vadd.f32 %v572, 1.0
        %v605 = vadd.f32 %v573, 1.0
        %v606 = vadd.f32 %v574, 1.0
        %v607 = vadd.f32 %v575, 1.0
        %v608 = vadd.f32 %v576, 1.0
        %v609 = vadd.f32 %v577, 1.0
        %v610 = vadd.f32 %v578, 1.0
        %v611 = vadd.f32 %v579, 1.0
        %v612 = vadd.f32 %v580, 1.0
        %v613 = vadd.f32 %v581, 1.0
        %v614 = vadd.f32 %v582, 1.0
        %v615 = vadd.f32 %v583, 1.0
        %v616 = vadd.f32 %v584, 1.0
        %v617 = vadd.f32 %v585, 1.0
        %v618 = vadd.f32 %v586, 1.0
        %v619 = vadd.f32 %v587, 1.0
        %v620 = vadd.f32 %v588, 1.0
        %v621 = vadd.f32 %v589, 1.0
        %v622 = vadd.f32 %v590, 1.0
        %v623 = vmul.f32 %v591, 0.5
        %v624 = vmul.f32 %v592, 0.5
        %v625 = vmul.f32 %v593, 0.5
        %v626 = vmul.f32 %v594, 0.5
        %v627 = vmul.f32 %v595, 0.5
        %v628 = vmul.f32 %v596, 0.5
        %v629 = vmul.f32 %v597, 0.5
        %v630 = vmul.f32 %v598, 0.5
        %v631 = vmul.f32 %v599, 0.5
        %v632 = vmul.f32 %v600, 0.5
        %v633 = vmul.f32 %v601, 0.5
        %v634 = vmul.f32 %v602, 0.5
        %v635 = vmul.f32 %v603, 0.5
        %v636 = vmul.f32 %v604, 0.5
        %v637 = vmul.f32 %v605, 0.5
        %v638 = vmul.f32 %v606, 0.5
        %v639 = vmul.f32 %v607, 0.5
        %v640 = vmul.f32 %v608, 0.5
        %v641 = vmul.f32 %v609, 0.5
        %v642 = vmul.f32 %v610, 0.5
        %v643 = vmul.f32 %v611, 0.5
        %v644 = vmul.f32 %v612, 0.5
        %v645 = vmul.f32 %v613, 0.5
        %v646 = vmul.f32 %v614, 0.5
        %v647 = vmul.f32 %v615, 0.5
        %v648 = vmul.f32 %v616, 0.5
        %v649 = vmul.f32 %v617, 0.5
        %v650 = vmul.f32 %v618, 0.5
        %v651 = vmul.f32 %v619, 0.5
        %v652 = vmul.f32 %v620, 0.5
        %v653 = vmul.f32 %v621, 0.5
        %v654 = vmul.f32 %v622, 0.5
        %v655 = vld [vmem:[%s2] sm:$0xff]
        %v656 = vld [vmem:[%s2 + $0x8] sm:$0xff]
        %v657 = vld [vmem:[%s2 + $0x10] sm:$0xff]
        %v658 = vld [vmem:[%s2 + $0x18] sm:$0xff]
        %v659 = vld [vmem:[%s2 + $0x20] sm:$0xff]
        %v660 = vld [vmem:[%s2 + $0x28] sm:$0xff]
        %v661 = vld [vmem:[%s2 + $0x30] sm:$0xff]
        %v662 = vld [vmem:[%s2 + $0x38] sm:$0xff]
        %v663 = vld [vmem:[%s2 + $0x40] sm:$0xff]
        %v664 = vld [vmem:[%s2 + $0x48] sm:$0xff]
        %v665 = vld [vmem:[%s2 + $0x50] sm:$0xff]
        %v666 = vld [vmem:[%s2 + $0x58] sm:$0xff]
        %v667 = vld [vmem:[%s2 + $0x60] sm:$0xff]
        %v668 = vld [vmem:[%s2 + $0x68] sm:$0xff]
        %v669 = vld [vmem:[%s2 + $0x70] sm:$0xff]
        %v670 = vld [vmem:[%s2 + $0x78] sm:$0xff]
        %671 = vmatprep.subr.mxu0 0.0
        %672 = vmatpush1.msra.mxu0 %v670
        %673 = vmatprep.subr.mxu0 0.0
        %674 = vmatpush1.msra.mxu0 %v669
        %675 = vmatprep.subr.mxu0 0.0
        %676 = vmatpush1.msra.mxu0 %v668
        %677 = vmatprep.subr.mxu0 0.0
        %678 = vmatpush1.msra.mxu0 %v667
        %679 = vmatprep.subr.mxu0 0.0
        %680 = vmatpush1.msra.mxu0 %v666
        %681 = vmatprep.subr.mxu0 0.0
        %682 = vmatpush1.msra.mxu0 %v665
        %683 = vmatprep.subr.mxu0 0.0
        %684 = vmatpush1.msra.mxu0 %v664
        %685 = vmatprep.subr.mxu0 0.0
        %686 = vmatpush1.msra.mxu0 %v663
        %687 = vmatprep.subr.mxu0 0.0
        %688 = vmatpush1.msra.mxu0 %v662
        %689 = vmatprep.subr.mxu0 0.0
        %690 = vmatpush1.msra.mxu0 %v661
        %691 = vmatprep.subr.mxu0 0.0
        %692 = vmatpush1.msra.mxu0 %v660
        %693 = vmatprep.subr.mxu0 0.0
        %694 = vmatpush1.msra.mxu0 %v659
        %695 = vmatprep.subr.mxu0 0.0
        %696 = vmatpush1.msra.mxu0 %v658
        %697 = vmatprep.subr.mxu0 0.0
        %698 = vmatpush1.msra.mxu0 %v657
        %699 = vmatprep.subr.mxu0 0.0
        %700 = vmatpush1.msra.mxu0 %v656
        %701 = vmatprep.subr.mxu0 0.0
        %702 = vmatpush1.msra.mxu0 %v655
        %703 = vmatprep.subr.mxu0 0.0
        %704 = vmatpush2.msra.mxu0 0.0
        %705 = vmatprep.subr.mxu0 0.0
        %706 = vmatpush2.msra.mxu0 0.0
        %707 = vmatprep.subr.mxu0 0.0
        %708 = vmatpush2.msra.mxu0 0.0
        %709 = vmatprep.subr.mxu0 0.0
        %710 = vmatpush2.msra.mxu0 0.0
        %711 = vmatprep.subr.mxu0 0.0
        %712 = vmatpush2.msra.mxu0 0.0
        %713 = vmatprep.subr.mxu0 0.0
        %714 = vmatpush2.msra.mxu0 0.0
        %715 = vmatprep.subr.mxu0 0.0
        %716 = vmatpush2.msra.mxu0 0.0
        %717 = vmatprep.subr.mxu0 0.0
        %718 = vmatpush2.msra.mxu0 0.0
        %719 = vmatprep.subr.mxu0 0.0
        %720 = vmatpush2.msra.mxu0 0.0
        %721 = vmatprep.subr.mxu0 0.0
        %722 = vmatpush2.msra.mxu0 0.0
        %723 = vmatprep.subr.mxu0 0.0
        %724 = vmatpush2.msra.mxu0 0.0
        %725 = vmatprep.subr.mxu0 0.0
        %726 = vmatpush2.msra.mxu0 0.0
        %727 = vmatprep.subr.mxu0 0.0
        %728 = vmatpush2.msra.mxu0 0.0
        %729 = vmatprep.subr.mxu0 0.0
        %730 = vmatpush2.msra.mxu0 0.0
        %731 = vmatprep.subr.mxu0 0.0
        %732 = vmatpush2.msra.mxu0 0.0
        %733 = vmatprep.subr.mxu0 0.0
        %734 = vmatpush2.msra.mxu0 0.0
        %735 = vmatprep.mubr.f32.mxu0 0.0
        %736 = vmatmul.mubr.f32.gmra.mxu0 %v623
        %v737 = vpop.f32.mrf.mxu0
        %v738 = vadd.f32 0.0, %v737
        %v739 = vpop.f32.mrf.mxu0
        %740 = vmatprep.mubr.f32.mxu0 0.0
        %741 = vmatmul.mubr.f32.gmra.mxu0 %v624
        %v742 = vpop.f32.mrf.mxu0
        %v743 = vadd.f32 0.0, %v742
        %v744 = vpop.f32.mrf.mxu0
        %745 = vmatprep.mubr.f32.mxu0 0.0
        %746 = vmatmul.mubr.f32.gmra.mxu0 %v625
        %v747 = vpop.f32.mrf.mxu0
        %v748 = vadd.f32 0.0, %v747
        %v749 = vpop.f32.mrf.mxu0
        %750 = vmatprep.mubr.f32.mxu0 0.0
        %751 = vmatmul.mubr.f32.gmra.mxu0 %v626
        %v752 = vpop.f32.mrf.mxu0
        %v753 = vadd.f32 0.0, %v752
        %v754 = vpop.f32.mrf.mxu0
        %755 = vmatprep.mubr.f32.mxu0 0.0
        %756 = vmatmul.mubr.f32.gmra.mxu0 %v627
        %v757 = vpop.f32.mrf.mxu0
        %v758 = vadd.f32 0.0, %v757
        %v759 = vpop.f32.mrf.mxu0
        %760 = vmatprep.mubr.f32.mxu0 0.0
        %761 = vmatmul.mubr.f32.gmra.mxu0 %v628
        %v762 = vpop.f32.mrf.mxu0
        %v763 = vadd.f32 0.0, %v762
        %v764 = vpop.f32.mrf.mxu0
        %765 = vmatprep.mubr.f32.mxu0 0.0
        %766 = vmatmul.mubr.f32.gmra.mxu0 %v629
        %v767 = vpop.f32.mrf.mxu0
        %v768 = vadd.f32 0.0, %v767
        %v769 = vpop.f32.mrf.mxu0
        %770 = vmatprep.mubr.f32.mxu0 0.0
        %771 = vmatmul.mubr.f32.gmra.mxu0 %v630
        %v772 = vpop.f32.mrf.mxu0
        %v773 = vadd.f32 0.0, %v772
        %v774 = vpop.f32.mrf.mxu0
        %775 = vmatprep.mubr.f32.mxu0 0.0
        %776 = vmatmul.mubr.f32.gmra.mxu0 %v631
        %v777 = vpop.f32.mrf.mxu0
        %v778 = vadd.f32 0.0, %v777
        %v779 = vpop.f32.mrf.mxu0
        %780 = vmatprep.mubr.f32.mxu0 0.0
        %781 = vmatmul.mubr.f32.gmra.mxu0 %v632
        %v782 = vpop.f32.mrf.mxu0
        %v783 = vadd.f32 0.0, %v782
        %v784 = vpop.f32.mrf.mxu0
        %785 = vmatprep.mubr.f32.mxu0 0.0
        %786 = vmatmul.mubr.f32.gmra.mxu0 %v633
        %v787 = vpop.f32.mrf.mxu0
        %v788 = vadd.f32 0.0, %v787
        %v789 = vpop.f32.mrf.mxu0
        %790 = vmatprep.mubr.f32.mxu0 0.0
        %791 = vmatmul.mubr.f32.gmra.mxu0 %v634
        %v792 = vpop.f32.mrf.mxu0
        %v793 = vadd.f32 0.0, %v792
        %v794 = vpop.f32.mrf.mxu0
        %795 = vmatprep.mubr.f32.mxu0 0.0
        %796 = vmatmul.mubr.f32.gmra.mxu0 %v635
        %v797 = vpop.f32.mrf.mxu0
        %v798 = vadd.f32 0.0, %v797
        %v799 = vpop.f32.mrf.mxu0
        %800 = vmatprep.mubr.f32.mxu0 0.0
        %801 = vmatmul.mubr.f32.gmra.mxu0 %v636
        %v802 = vpop.f32.mrf.mxu0
        %v803 = vadd.f32 0.0, %v802
        %v804 = vpop.f32.mrf.mxu0
        %805 = vmatprep.mubr.f32.mxu0 0.0
        %806 = vmatmul.mubr.f32.gmra.mxu0 %v637
        %v807 = vpop.f32.mrf.mxu0
        %v808 = vadd.f32 0.0, %v807
        %v809 = vpop.f32.mrf.mxu0
        %810 = vmatprep.mubr.f32.mxu0 0.0
        %811 = vmatmul.mubr.f32.gmra.mxu0 %v638
        %v812 = vpop.f32.mrf.mxu0
        %v813 = vadd.f32 0.0, %v812
        %v814 = vpop.f32.mrf.mxu0
        %815 = vmatprep.mubr.f32.mxu0 0.0
        %816 = vmatmul.mubr.f32.gmra.mxu0 %v639
        %v817 = vpop.f32.mrf.mxu0
        %v818 = vadd.f32 0.0, %v817
        %v819 = vpop.f32.mrf.mxu0
        %820 = vmatprep.mubr.f32.mxu0 0.0
        %821 = vmatmul.mubr.f32.gmra.mxu0 %v640
        %v822 = vpop.f32.mrf.mxu0
        %v823 = vadd.f32 0.0, %v822
        %v824 = vpop.f32.mrf.mxu0
        %825 = vmatprep.mubr.f32.mxu0 0.0
        %826 = vmatmul.mubr.f32.gmra.mxu0 %v641
        %v827 = vpop.f32.mrf.mxu0
        %v828 = vadd.f32 0.0, %v827
        %v829 = vpop.f32.mrf.mxu0
        %830 = vmatprep.mubr.f32.mxu0 0.0
        %831 = vmatmul.mubr.f32.gmra.mxu0 %v642
        %v832 = vpop.f32.mrf.mxu0
        %v833 = vadd.f32 0.0, %v832
        %v834 = vpop.f32.mrf.mxu0
        %835 = vmatprep.mubr.f32.mxu0 0.0
        %836 = vmatmul.mubr.f32.gmra.mxu0 %v643
        %v837 = vpop.f32.mrf.mxu0
        %v838 = vadd.f32 0.0, %v837
        %v839 = vpop.f32.mrf.mxu0
        %840 = vmatprep.mubr.f32.mxu0 0.0
        %841 = vmatmul.mubr.f32.gmra.mxu0 %v644
        %v842 = vpop.f32.mrf.mxu0
        %v843 = vadd.f32 0.0, %v842
        %v844 = vpop.f32.mrf.mxu0
        %845 = vmatprep.mubr.f32.mxu0 0.0
        %846 = vmatmul.mubr.f32.gmra.mxu0 %v645
        %v847 = vpop.f32.mrf.mxu0
        %v848 = vadd.f32 0.0, %v847
        %v849 = vpop.f32.mrf.mxu0
        %850 = vmatprep.mubr.f32.mxu0 0.0
        %851 = vmatmul.mubr.f32.gmra.mxu0 %v646
        %v852 = vpop.f32.mrf.mxu0
        %v853 = vadd.f32 0.0, %v852
        %v854 = vpop.f32.mrf.mxu0
        %855 = vmatprep.mubr.f32.mxu0 0.0
        %856 = vmatmul.mubr.f32.gmra.mxu0 %v647
        %v857 = vpop.f32.mrf.mxu0
        %v858 = vadd.f32 0.0, %v857
        %v859 = vpop.f32.mrf.mxu0
        %860 = vmatprep.mubr.f32.mxu0 0.0
        %861 = vmatmul.mubr.f32.gmra.mxu0 %v648
        %v862 = vpop.f32.mrf.mxu0
        %v863 = vadd.f32 0.0, %v862
        %v864 = vpop.f32.mrf.mxu0
        %865 = vmatprep.mubr.f32.mxu0 0.0
        %866 = vmatmul.mubr.f32.gmra.mxu0 %v649
        %v867 = vpop.f32.mrf.mxu0
        %v868 = vadd.f32 0.0, %v867
        %v869 = vpop.f32.mrf.mxu0
        %870 = vmatprep.mubr.f32.mxu0 0.0
        %871 = vmatmul.mubr.f32.gmra.mxu0 %v650
        %v872 = vpop.f32.mrf.mxu0
        %v873 = vadd.f32 0.0, %v872
        %v874 = vpop.f32.mrf.mxu0
        %875 = vmatprep.mubr.f32.mxu0 0.0
        %876 = vmatmul.mubr.f32.gmra.mxu0 %v651
        %v877 = vpop.f32.mrf.mxu0
        %v878 = vadd.f32 0.0, %v877
        %v879 = vpop.f32.mrf.mxu0
        %880 = vmatprep.mubr.f32.mxu0 0.0
        %881 = vmatmul.mubr.f32.gmra.mxu0 %v652
        %v882 = vpop.f32.mrf.mxu0
        %v883 = vadd.f32 0.0, %v882
        %v884 = vpop.f32.mrf.mxu0
        %885 = vmatprep.mubr.f32.mxu0 0.0
        %886 = vmatmul.mubr.f32.gmra.mxu0 %v653
        %v887 = vpop.f32.mrf.mxu0
        %v888 = vadd.f32 0.0, %v887
        %v889 = vpop.f32.mrf.mxu0
        %890 = vmatprep.mubr.f32.mxu0 0.0
        %891 = vmatmul.mubr.f32.gmra.mxu0 %v654
        %v892 = vpop.f32.mrf.mxu0
        %v893 = vadd.f32 0.0, %v892
        %v894 = vpop.f32.mrf.mxu0
        %895 = vdwg.mxu0
        %896 = vst [vmem:[%s164] sm:$0xff] %v738
        %897 = vst [vmem:[%s164 + $0x8] sm:$0xff] %v743
        %898 = vst [vmem:[%s164 + $0x10] sm:$0xff] %v748
        %899 = vst [vmem:[%s164 + $0x18] sm:$0xff] %v753
        %900 = vst [vmem:[%s164 + $0x20] sm:$0xff] %v758
        %901 = vst [vmem:[%s164 + $0x28] sm:$0xff] %v763
        %902 = vst [vmem:[%s164 + $0x30] sm:$0xff] %v768
        %903 = vst [vmem:[%s164 + $0x38] sm:$0xff] %v773
        %904 = vst [vmem:[%s164 + $0x40] sm:$0xff] %v778
        %905 = vst [vmem:[%s164 + $0x48] sm:$0xff] %v783
        %906 = vst [vmem:[%s164 + $0x50] sm:$0xff] %v788
        %907 = vst [vmem:[%s164 + $0x58] sm:$0xff] %v793
        %908 = vst [vmem:[%s164 + $0x60] sm:$0xff] %v798
        %909 = vst [vmem:[%s164 + $0x68] sm:$0xff] %v803
        %910 = vst [vmem:[%s164 + $0x70] sm:$0xff] %v808
        %911 = vst [vmem:[%s164 + $0x78] sm:$0xff] %v813
        %912 = vst [vmem:[%s164 + $0x80] sm:$0xff] %v818
        %913 = vst [vmem:[%s164 + $0x88] sm:$0xff] %v823
        %914 = vst [vmem:[%s164 + $0x90] sm:$0xff] %v828
        %915 = vst [vmem:[%s164 + $0x98] sm:$0xff] %v833
        %916 = vst [vmem:[%s164 + $0xa0] sm:$0xff] %v838
        %917 = vst [vmem:[%s164 + $0xa8] sm:$0xff] %v843
        %918 = vst [vmem:[%s164 + $0xb0] sm:$0xff] %v848
        %919 = vst [vmem:[%s164 + $0xb8] sm:$0xff] %v853
        %920 = vst [vmem:[%s164 + $0xc0] sm:$0xff] %v858
        %921 = vst [vmem:[%s164 + $0xc8] sm:$0xff] %v863
        %922 = vst [vmem:[%s164 + $0xd0] sm:$0xff] %v868
        %923 = vst [vmem:[%s164 + $0xd8] sm:$0xff] %v873
        %924 = vst [vmem:[%s164 + $0xe0] sm:$0xff] %v878
        %925 = vst [vmem:[%s164 + $0xe8] sm:$0xff] %v883
        %926 = vst [vmem:[%s164 + $0xf0] sm:$0xff] %v888
        %927 = vst [vmem:[%s164 + $0xf8] sm:$0xff] %v893
        %s928 = sand.u32 %s93, 1
        %s929 = scalar_lea.sflag [#allocation3], %s928
        %s930 = sand.u32 %s93, 1
        %s931 = smul.addr %s930, 256
        %s932 = scalar_lea.vmem [#allocation2], %s931
        // Predicated region
        $region33: #{tpu_custom_call.1} parent=31 // pred_check
          %p933 = pneg %p103
        $region34: #{tpu_custom_call.1} parent=31 // pred_check_branch
          %935 = sbr.rel (%p933) target = $region36
        $region35: #{tpu_custom_call.1} parent=31 // pred_region
          %s936 = smul.u32 32, %s17
          %s938 = ssub.s32 4096, 4096
          %939 = vsyncadd %s929, %s938
          %s940 = smul.addr %s936, 128
          %s941 = scalar_lea.hbm %s3, %s940
          %s942 = sshll.u32 %s932, 4
          %s943 = int_to_ptr.vmem [resolvable:$true] %s942
          %948 = dma.vmem_to_hbm [thread:$0]  %s943, 4096, %s941, %s929, 128, 128, 8
        $region36: #{tpu_custom_call.1} parent=31 // pred_fallthru
          _
      $region32: #{tpu_custom_call.1} parent=5 // pred_fallthru
        _
      %p949 = scmp.le.s32.totalorder 2, %s12
      // Predicated region
      $region37: #{tpu_custom_call.1} parent=5 // pred_check
        %p950 = pneg %p949
      $region38: #{tpu_custom_call.1} parent=5 // pred_check_branch
        %952 = sbr.rel (%p950) target = $region40
      $region39: #{tpu_custom_call.1} parent=5 // pred_region
        %s953 = ssub.s32 %s12, 2
        // Predicated region
        $region41: #{tpu_custom_call.1} parent=39 // pred_check
          %p954 = pneg %p109
        $region42: #{tpu_custom_call.1} parent=39 // pred_check_branch
          %956 = sbr.rel (%p954) target = $region44
        $region43: #{tpu_custom_call.1} parent=39 // pred_region
          %s957 = sand.u32 %s94, 1
          %s958 = scalar_lea.sflag [#allocation3], %s957
          %s959 = sand.u32 %s94, 1
          %s960 = smul.addr %s959, 256
          %s961 = scalar_lea.vmem [#allocation2], %s960
          %962 = dma.done %s958, 4096
        $region44: #{tpu_custom_call.1} parent=39 // pred_fallthru
          _
      $region40: #{tpu_custom_call.1} parent=5 // pred_fallthru
        _
    $region6: #{tpu_custom_call.1} parent=1 // loop_footer
      %s16 = sadd.s32 1, %s12
    $region7: #{tpu_custom_call.1} parent=1 // loop_footer_branch
      %11 = sbr.rel target = $region3
    $region8: #{tpu_custom_call.1} parent=1 // loop_exit
      _
    %963 = vsyncpa [#allocation3], 1
    %s964 = scalar_lea.sflag [#allocation3], 1
    %965 = vsyncpa %s964, 1

// kernel: tpu_custom_call.1
$region0: #{tpu_custom_call.1}
  #allocation0 [shape = 'u32[]', space=smem, size = 0x4, offset = 0x4, fixed_abs, tag = 'smem constant byte address 0x4 - core index']
  #allocation1 [shape = 'u32[144,128]{1,0:T(1,128)}', space=vmem, size = 0x12000, scoped, tag = 'internal scratch']
  %s0 = inlined_call_operand.vmem [shape: f32[512,8], index: 0, kind: input, shape index: {}]
  %s1 = inlined_call_operand.vmem [shape: f32[8,128], index: 1, kind: input, shape index: {}]
  %s2 = inlined_call_operand.vmem [shape: f32[128,128], index: 2, kind: input, shape index: {}]
  %s3 = inlined_call_operand.hbm [shape: f32[512,128], index: 3, kind: output, shape index: {}]
  %s4 = sld [smem:[#allocation0]]
  $region45: #{tpu_custom_call.1} parent=0
    _
  %s6 = ssub.s32 1, %s4
  %s7 = scalar_select 0, %s6, %s4
  $region1: #{tpu_custom_call.1} parent=0
    #allocation2 [shape = 'u8[262144]{0}', space=vmem, size = 0x40000, scoped, tag = 'output window, operand 0']
    #allocation3 [shape = 's32[2]{0}', space=sflag, size = 0x8, scoped, tag = 'scoped memory for tpu_custom_call.1']
    %8 = vsyncpa [#allocation3], 0
    %s9 = scalar_lea.sflag [#allocation3], 1
    %10 = vsyncpa %s9, 0
    loop: start=0, step=1, limit=4
    $region2: #{tpu_custom_call.1} parent=1 // loop_pre_header
      _
    $region3: #{tpu_custom_call.1} parent=1 // loop_header
      %s12 = sphi 0, %s16
      %p13 = scmp.ge.s32.totalorder %s12, 4
      %s22 = sphi 0, %s24
      %s25 = sphi 0, %s22
      %s26 = sphi 0, %s25
      %s42 = sphi 0, %s26
      %s46 = sphi 0, %s46
      %s48 = sphi 0, %s46
      %s49 = sphi 0, %s48
      %s63 = sphi 0, %s49
      %s67 = sphi 0, %s67
      %s69 = sphi 0, %s67
      %s70 = sphi 0, %s69
      %s84 = sphi 0, %s70
      %s90 = sphi 0, %s92
      %s93 = sphi 0, %s90
      %s94 = sphi 0, %s93
      %s110 = sphi 0, %s94
    $region4: #{tpu_custom_call.1} parent=1 // loop_header_branch
      %15 = sbr.rel (%p13) target = $region8
    $region5: #{tpu_custom_call.1} parent=1 // loop_body
      %s17 = ssub.s32 %s12, 1
      %s18 = ssub.s32 %s12, 2
      %s19 = sadd.s32 %s12, 1
      %s20 = ssub.s32 %s12, %s19
      %p21 = scmp.eq.s32.totalorder %s20, 0
      %s23 = sadd.s32 %s22, 1
      %s24 = scalar_select %p21, %s22, %s23
      %p27 = pneg %p21
      %p28 = scmp.eq.s32.totalorder %s12, 1
      %p29 = por %p27, %p28
      %p30 = scmp.ne.s32.totalorder %s22, %s25
      %p31 = scmp.eq.s32.totalorder %s12, 0
      %p32 = por %p30, %p31
      %p33 = scmp.ne.s32.totalorder %s22, %s25
      %p34 = scmp.eq.s32.totalorder %s17, 1
      %p35 = por %p33, %p34
      %p36 = scmp.ne.s32.totalorder %s25, %s26
      %p37 = scmp.eq.s32.totalorder %s17, 0
      %p38 = por %p36, %p37
      %p39 = scmp.ne.s32.totalorder %s25, %s26
      %p40 = scmp.eq.s32.totalorder %s18, 1
      %p41 = por %p39, %p40
      %p43 = scmp.ne.s32.totalorder %s26, %s42
      %p44 = scmp.eq.s32.totalorder %s18, 0
      %p45 = por %p43, %p44
      %s47 = sadd.s32 %s46, 1
      %p50 = scmp.eq.s32.totalorder %s12, 1
      %p51 = scmp.ne.s32.totalorder %s46, %s48
      %p52 = scmp.eq.s32.totalorder %s12, 0
      %p53 = por %p51, %p52
      %p54 = scmp.ne.s32.totalorder %s46, %s48
      %p55 = scmp.eq.s32.totalorder %s17, 1
      %p56 = por %p54, %p55
      %p57 = scmp.ne.s32.totalorder %s48, %s49
      %p58 = scmp.eq.s32.totalorder %s17, 0
      %p59 = por %p57, %p58
      %p60 = scmp.ne.s32.totalorder %s48, %s49
      %p61 = scmp.eq.s32.totalorder %s18, 1
      %p62 = por %p60, %p61
      %p64 = scmp.ne.s32.totalorder %s49, %s63
      %p65 = scmp.eq.s32.totalorder %s18, 0
      %p66 = por %p64, %p65
      %s68 = sadd.s32 %s67, 1
      %p71 = scmp.eq.s32.totalorder %s12, 1
      %p72 = scmp.ne.s32.totalorder %s67, %s69
      %p73 = scmp.eq.s32.totalorder %s12, 0
      %p74 = por %p72, %p73
      %p75 = scmp.ne.s32.totalorder %s67, %s69
      %p76 = scmp.eq.s32.totalorder %s17, 1
      %p77 = por %p75, %p76
      %p78 = scmp.ne.s32.totalorder %s69, %s70
      %p79 = scmp.eq.s32.totalorder %s17, 0
      %p80 = por %p78, %p79
      %p81 = scmp.ne.s32.totalorder %s69, %s70
      %p82 = scmp.eq.s32.totalorder %s18, 1
      %p83 = por %p81, %p82
      %p85 = scmp.ne.s32.totalorder %s70, %s84
      %p86 = scmp.eq.s32.totalorder %s18, 0
      %p87 = por %p85, %p86
      %s88 = ssub.s32 %s12, %s19
      %p89 = scmp.eq.s32.totalorder %s88, 0
      %s91 = sadd.s32 %s90, 1
      %s92 = scalar_select %p89, %s90, %s91
      %p95 = pneg %p89
      %p96 = scmp.eq.s32.totalorder %s12, 1
      %p97 = por %p95, %p96
      %p98 = scmp.ne.s32.totalorder %s90, %s93
      %p99 = scmp.eq.s32.totalorder %s12, 0
      %p100 = por %p98, %p99
      %p101 = scmp.ne.s32.totalorder %s90, %s93
      %p102 = scmp.eq.s32.totalorder %s17, 1
      %p103 = por %p101, %p102
      %p104 = scmp.ne.s32.totalorder %s93, %s94
      %p105 = scmp.eq.s32.totalorder %s17, 0
      %p106 = por %p104, %p105
      %p107 = scmp.ne.s32.totalorder %s93, %s94
      %p108 = scmp.eq.s32.totalorder %s18, 1
      %p109 = por %p107, %p108
      %p111 = scmp.ne.s32.totalorder %s94, %s110
      %p112 = scmp.eq.s32.totalorder %s18, 0
      %p113 = por %p111, %p112
      %p114 = scmp.le.s32.totalorder 1, %s12
      %p115 = scmp.lt.s32.totalorder %s12, 3
      %p116 = pnand %p114, %p115
      %p117 = pneg %p116
      // Predicated region
      $region9: #{tpu_custom_call.1} parent=5 // pred_check
        _
      $region10: #{tpu_custom_call.1} parent=5 // pred_check_branch
        %119 = sbr.rel (%p116) target = $region12
      $region11: #{tpu_custom_call.1} parent=5 // pred_region
        %s120 = ssub.s32 %s12, 1
        // Predicated region
        $region13: #{tpu_custom_call.1} parent=11 // pred_check
          %p121 = pneg %p59
        $region14: #{tpu_custom_call.1} parent=11 // pred_check_branch
          %123 = sbr.rel (%p121) target = $region16
        $region15: #{tpu_custom_call.1} parent=11 // pred_region
          _
        $region16: #{tpu_custom_call.1} parent=11 // pred_fallthru
          _
        // Predicated region
        $region17: #{tpu_custom_call.1} parent=11 // pred_check
          %p124 = pneg %p80
        $region18: #{tpu_custom_call.1} parent=11 // pred_check_branch
          %126 = sbr.rel (%p124) target = $region20
        $region19: #{tpu_custom_call.1} parent=11 // pred_region
          _
        $region20: #{tpu_custom_call.1} parent=11 // pred_fallthru
          _
      $region12: #{tpu_custom_call.1} parent=5 // pred_fallthru
        _
      %p127 = scmp.lt.s32.totalorder %s12, 2
      // Predicated region
      $region21: #{tpu_custom_call.1} parent=5 // pred_check
        %p128 = pneg %p127
      $region22: #{tpu_custom_call.1} parent=5 // pred_check_branch
        %130 = sbr.rel (%p128) target = $region24
      $region23: #{tpu_custom_call.1} parent=5 // pred_region
        // Predicated region
        $region25: #{tpu_custom_call.1} parent=23 // pred_check
          %p131 = pneg %p32
        $region26: #{tpu_custom_call.1} parent=23 // pred_check_branch
          %133 = sbr.rel (%p131) target = $region28
        $region27: #{tpu_custom_call.1} parent=23 // pred_region
          %s134 = smul.u32 32, %s12
          %p135 = scmp.lt.s32.totalorder %s134, 63
          %s136 = scalar_select %p135, %s134, 63
          %s137 = smul.addr %s136, 8
          %s138 = scalar_lea.vmem %s0, %s137
          %s139 = smul.u32 32, %s12
        $region28: #{tpu_custom_call.1} parent=23 // pred_fallthru
          _
      $region24: #{tpu_custom_call.1} parent=5 // pred_fallthru
        _
      %p140 = scmp.le.s32.totalorder 1, %s12
      %p141 = scmp.lt.s32.totalorder %s12, 3
      %p142 = pnand %p140, %p141
      %p143 = pneg %p142
      // Predicated region
      $region29: #{tpu_custom_call.1} parent=5 // pred_check
        _
      $region30: #{tpu_custom_call.1} parent=5 // pred_check_branch
        %145 = sbr.rel (%p142) target = $region32
      $region31: #{tpu_custom_call.1} parent=5 // pred_region
        %s146 = ssub.s32 %s12, 1
        %s147 = smul.u32 32, %s17
        %p148 = scmp.lt.s32.totalorder %s147, 63
        %s149 = scalar_select %p148, %s147, 63
        %s150 = smul.addr %s149, 8
        %s151 = scalar_lea.vmem %s0, %s150
        %p152 = pneg %p38
        %p153 = pneg %p35
        %p154 = pneg %p59
        %p155 = pneg %p56
        %p156 = pneg %p80
        %p157 = pneg %p77
        %p158 = pneg %p106
        %p159 = pneg %p103
        %s160 = sand.u32 %s93, 1
        %s161 = scalar_lea.sflag [#allocation3], %s160
        %s162 = sand.u32 %s93, 1
        %s163 = smul.addr %s162, 256
        %s164 = scalar_lea.vmem [#allocation2], %s163
        %s165 = smul.u32 32, %s17
        %p166 = scmp.lt.s32.totalorder %s165, 63
        %s167 = scalar_select %p166, %s165, 63
        %s168 = smul.addr %s167, 8
        %s169 = scalar_lea.vmem %s0, %s168
        %s170 = smul.u32 32, %s17
        %s171 = smul.u32 32, %s17
        %v172 = vld [vmem:[%s169] sm:$0xff]
        %v173 = vld [vmem:[%s169 + $0x8] sm:$0xff]
        %v174 = vld [vmem:[%s169 + $0x10] sm:$0xff]
        %v175 = vld [vmem:[%s169 + $0x18] sm:$0xff]
        %v176 = vld [vmem:[%s169 + $0x20] sm:$0xff]
        %v177 = vld [vmem:[%s169 + $0x28] sm:$0xff]
        %v178 = vld [vmem:[%s169 + $0x30] sm:$0xff]
        %v179 = vld [vmem:[%s169 + $0x38] sm:$0xff]
        %v180 = vld [vmem:[%s169 + $0x40] sm:$0xff]
        %v181 = vld [vmem:[%s169 + $0x48] sm:$0xff]
        %v182 = vld [vmem:[%s169 + $0x50] sm:$0xff]
        %v183 = vld [vmem:[%s169 + $0x58] sm:$0xff]
        %v184 = vld [vmem:[%s169 + $0x60] sm:$0xff]
        %v185 = vld [vmem:[%s169 + $0x68] sm:$0xff]
        %v186 = vld [vmem:[%s169 + $0x70] sm:$0xff]
        %v187 = vld [vmem:[%s169 + $0x78] sm:$0xff]
        %v188 = vld [vmem:[%s169 + $0x80] sm:$0xff]
        %v189 = vld [vmem:[%s169 + $0x88] sm:$0xff]
        %v190 = vld [vmem:[%s169 + $0x90] sm:$0xff]
        %v191 = vld [vmem:[%s169 + $0x98] sm:$0xff]
        %v192 = vld [vmem:[%s169 + $0xa0] sm:$0xff]
        %v193 = vld [vmem:[%s169 + $0xa8] sm:$0xff]
        %v194 = vld [vmem:[%s169 + $0xb0] sm:$0xff]
        %v195 = vld [vmem:[%s169 + $0xb8] sm:$0xff]
        %v196 = vld [vmem:[%s169 + $0xc0] sm:$0xff]
        %v197 = vld [vmem:[%s169 + $0xc8] sm:$0xff]
        %v198 = vld [vmem:[%s169 + $0xd0] sm:$0xff]
        %v199 = vld [vmem:[%s169 + $0xd8] sm:$0xff]
        %v200 = vld [vmem:[%s169 + $0xe0] sm:$0xff]
        %v201 = vld [vmem:[%s169 + $0xe8] sm:$0xff]
        %v202 = vld [vmem:[%s169 + $0xf0] sm:$0xff]
        %v203 = vld [vmem:[%s169 + $0xf8] sm:$0xff]
        %v204 = vld [vmem:[%s1] sm:$0xff]
        %vm205 = vcmask 64512
        %v207 = vsel %vm205, %v172, 0
        %v210 = vsel %vm205, %v173, 0
        %v213 = vsel %vm205, %v174, 0
        %v216 = vsel %vm205, %v175, 0
        %v219 = vsel %vm205, %v176, 0
        %v222 = vsel %vm205, %v177, 0
        %v225 = vsel %vm205, %v178, 0
        %v228 = vsel %vm205, %v179, 0
        %v231 = vsel %vm205, %v180, 0
        %v234 = vsel %vm205, %v181, 0
        %v237 = vsel %vm205, %v182, 0
        %v240 = vsel %vm205, %v183, 0
        %v243 = vsel %vm205, %v184, 0
        %v246 = vsel %vm205, %v185, 0
        %v249 = vsel %vm205, %v186, 0
        %v252 = vsel %vm205, %v187, 0
        %v255 = vsel %vm205, %v188, 0
        %v258 = vsel %vm205, %v189, 0
        %v261 = vsel %vm205, %v190, 0
        %v264 = vsel %vm205, %v191, 0
        %v267 = vsel %vm205, %v192, 0
        %v270 = vsel %vm205, %v193, 0
        %v273 = vsel %vm205, %v194, 0
        %v276 = vsel %vm205, %v195, 0
        %v279 = vsel %vm205, %v196, 0
        %v282 = vsel %vm205, %v197, 0
        %v285 = vsel %vm205, %v198, 0
        %v288 = vsel %vm205, %v199, 0
        %v291 = vsel %vm205, %v200, 0
        %v294 = vsel %vm205, %v201, 0
        %v297 = vsel %vm205, %v202, 0
        %v300 = vsel %vm205, %v203, 0
        %302 = vmatprep.subr.mxu0 0.0
        %303 = vmatpush1.msra.mxu0 0.0
        %304 = vmatprep.subr.mxu0 0.0
        %305 = vmatpush1.msra.mxu0 0.0
        %306 = vmatprep.subr.mxu0 0.0
        %307 = vmatpush1.msra.mxu0 0.0
        %308 = vmatprep.subr.mxu0 0.0
        %309 = vmatpush1.msra.mxu0 0.0
        %310 = vmatprep.subr.mxu0 0.0
        %311 = vmatpush1.msra.mxu0 0.0
        %312 = vmatprep.subr.mxu0 0.0
        %313 = vmatpush1.msra.mxu0 0.0
        %314 = vmatprep.subr.mxu0 0.0
        %315 = vmatpush1.msra.mxu0 0.0
        %316 = vmatprep.subr.mxu0 0.0
        %317 = vmatpush1.msra.mxu0 0.0
        %318 = vmatprep.subr.mxu0 0.0
        %319 = vmatpush1.msra.mxu0 0.0
        %320 = vmatprep.subr.mxu0 0.0
        %321 = vmatpush1.msra.mxu0 0.0
        %322 = vmatprep.subr.mxu0 0.0
        %323 = vmatpush1.msra.mxu0 0.0
        %324 = vmatprep.subr.mxu0 0.0
        %325 = vmatpush1.msra.mxu0 0.0
        %326 = vmatprep.subr.mxu0 0.0
        %327 = vmatpush1.msra.mxu0 0.0
        %328 = vmatprep.subr.mxu0 0.0
        %329 = vmatpush1.msra.mxu0 0.0
        %330 = vmatprep.subr.mxu0 0.0
        %331 = vmatpush1.msra.mxu0 0.0
        %332 = vmatprep.subr.mxu0 0.0
        %333 = vmatpush1.msra.mxu0 %v204
        %334 = vmatprep.subr.mxu0 0.0
        %335 = vmatpush2.msra.mxu0 0.0
        %336 = vmatprep.subr.mxu0 0.0
        %337 = vmatpush2.msra.mxu0 0.0
        %338 = vmatprep.subr.mxu0 0.0
        %339 = vmatpush2.msra.mxu0 0.0
        %340 = vmatprep.subr.mxu0 0.0
        %341 = vmatpush2.msra.mxu0 0.0
        %342 = vmatprep.subr.mxu0 0.0
        %343 = vmatpush2.msra.mxu0 0.0
        %344 = vmatprep.subr.mxu0 0.0
        %345 = vmatpush2.msra.mxu0 0.0
        %346 = vmatprep.subr.mxu0 0.0
        %347 = vmatpush2.msra.mxu0 0.0
        %348 = vmatprep.subr.mxu0 0.0
        %349 = vmatpush2.msra.mxu0 0.0
        %350 = vmatprep.subr.mxu0 0.0
        %351 = vmatpush2.msra.mxu0 0.0
        %352 = vmatprep.subr.mxu0 0.0
        %353 = vmatpush2.msra.mxu0 0.0
        %354 = vmatprep.subr.mxu0 0.0
        %355 = vmatpush2.msra.mxu0 0.0
        %356 = vmatprep.subr.mxu0 0.0
        %357 = vmatpush2.msra.mxu0 0.0
        %358 = vmatprep.subr.mxu0 0.0
        %359 = vmatpush2.msra.mxu0 0.0
        %360 = vmatprep.subr.mxu0 0.0
        %361 = vmatpush2.msra.mxu0 0.0
        %362 = vmatprep.subr.mxu0 0.0
        %363 = vmatpush2.msra.mxu0 0.0
        %364 = vmatprep.subr.mxu0 0.0
        %365 = vmatpush2.msra.mxu0 0.0
        %366 = vmatprep.mubr.f32.mxu0 0.0
        %367 = vmatmul.mubr.f32.gmra.mxu0 %v207
        %v368 = vpop.f32.mrf.mxu0
        %v369 = vadd.f32 0.0, %v368
        %v370 = vpop.f32.mrf.mxu0
        %371 = vmatprep.mubr.f32.mxu0 0.0
        %372 = vmatmul.mubr.f32.gmra.mxu0 %v210
        %v373 = vpop.f32.mrf.mxu0
        %v374 = vadd.f32 0.0, %v373
        %v375 = vpop.f32.mrf.mxu0
        %376 = vmatprep.mubr.f32.mxu0 0.0
        %377 = vmatmul.mubr.f32.gmra.mxu0 %v213
        %v378 = vpop.f32.mrf.mxu0
        %v379 = vadd.f32 0.0, %v378
        %v380 = vpop.f32.mrf.mxu0
        %381 = vmatprep.mubr.f32.mxu0 0.0
        %382 = vmatmul.mubr.f32.gmra.mxu0 %v216
        %v383 = vpop.f32.mrf.mxu0
        %v384 = vadd.f32 0.0, %v383
        %v385 = vpop.f32.mrf.mxu0
        %386 = vmatprep.mubr.f32.mxu0 0.0
        %387 = vmatmul.mubr.f32.gmra.mxu0 %v219
        %v388 = vpop.f32.mrf.mxu0
        %v389 = vadd.f32 0.0, %v388
        %v390 = vpop.f32.mrf.mxu0
        %391 = vmatprep.mubr.f32.mxu0 0.0
        %392 = vmatmul.mubr.f32.gmra.mxu0 %v222
        %v393 = vpop.f32.mrf.mxu0
        %v394 = vadd.f32 0.0, %v393
        %v395 = vpop.f32.mrf.mxu0
        %396 = vmatprep.mubr.f32.mxu0 0.0
        %397 = vmatmul.mubr.f32.gmra.mxu0 %v225
        %v398 = vpop.f32.mrf.mxu0
        %v399 = vadd.f32 0.0, %v398
        %v400 = vpop.f32.mrf.mxu0
        %401 = vmatprep.mubr.f32.mxu0 0.0
        %402 = vmatmul.mubr.f32.gmra.mxu0 %v228
        %v403 = vpop.f32.mrf.mxu0
        %v404 = vadd.f32 0.0, %v403
        %v405 = vpop.f32.mrf.mxu0
        %406 = vmatprep.mubr.f32.mxu0 0.0
        %407 = vmatmul.mubr.f32.gmra.mxu0 %v231
        %v408 = vpop.f32.mrf.mxu0
        %v409 = vadd.f32 0.0, %v408
        %v410 = vpop.f32.mrf.mxu0
        %411 = vmatprep.mubr.f32.mxu0 0.0
        %412 = vmatmul.mubr.f32.gmra.mxu0 %v234
        %v413 = vpop.f32.mrf.mxu0
        %v414 = vadd.f32 0.0, %v413
        %v415 = vpop.f32.mrf.mxu0
        %416 = vmatprep.mubr.f32.mxu0 0.0
        %417 = vmatmul.mubr.f32.gmra.mxu0 %v237
        %v418 = vpop.f32.mrf.mxu0
        %v419 = vadd.f32 0.0, %v418
        %v420 = vpop.f32.mrf.mxu0
        %421 = vmatprep.mubr.f32.mxu0 0.0
        %422 = vmatmul.mubr.f32.gmra.mxu0 %v240
        %v423 = vpop.f32.mrf.mxu0
        %v424 = vadd.f32 0.0, %v423
        %v425 = vpop.f32.mrf.mxu0
        %426 = vmatprep.mubr.f32.mxu0 0.0
        %427 = vmatmul.mubr.f32.gmra.mxu0 %v243
        %v428 = vpop.f32.mrf.mxu0
        %v429 = vadd.f32 0.0, %v428
        %v430 = vpop.f32.mrf.mxu0
        %431 = vmatprep.mubr.f32.mxu0 0.0
        %432 = vmatmul.mubr.f32.gmra.mxu0 %v246
        %v433 = vpop.f32.mrf.mxu0
        %v434 = vadd.f32 0.0, %v433
        %v435 = vpop.f32.mrf.mxu0
        %436 = vmatprep.mubr.f32.mxu0 0.0
        %437 = vmatmul.mubr.f32.gmra.mxu0 %v249
        %v438 = vpop.f32.mrf.mxu0
        %v439 = vadd.f32 0.0, %v438
        %v440 = vpop.f32.mrf.mxu0
        %441 = vmatprep.mubr.f32.mxu0 0.0
        %442 = vmatmul.mubr.f32.gmra.mxu0 %v252
        %v443 = vpop.f32.mrf.mxu0
        %v444 = vadd.f32 0.0, %v443
        %v445 = vpop.f32.mrf.mxu0
        %446 = vmatprep.mubr.f32.mxu0 0.0
        %447 = vmatmul.mubr.f32.gmra.mxu0 %v255
        %v448 = vpop.f32.mrf.mxu0
        %v449 = vadd.f32 0.0, %v448
        %v450 = vpop.f32.mrf.mxu0
        %451 = vmatprep.mubr.f32.mxu0 0.0
        %452 = vmatmul.mubr.f32.gmra.mxu0 %v258
        %v453 = vpop.f32.mrf.mxu0
        %v454 = vadd.f32 0.0, %v453
        %v455 = vpop.f32.mrf.mxu0
        %456 = vmatprep.mubr.f32.mxu0 0.0
        %457 = vmatmul.mubr.f32.gmra.mxu0 %v261
        %v458 = vpop.f32.mrf.mxu0
        %v459 = vadd.f32 0.0, %v458
        %v460 = vpop.f32.mrf.mxu0
        %461 = vmatprep.mubr.f32.mxu0 0.0
        %462 = vmatmul.mubr.f32.gmra.mxu0 %v264
        %v463 = vpop.f32.mrf.mxu0
        %v464 = vadd.f32 0.0, %v463
        %v465 = vpop.f32.mrf.mxu0
        %466 = vmatprep.mubr.f32.mxu0 0.0
        %467 = vmatmul.mubr.f32.gmra.mxu0 %v267
        %v468 = vpop.f32.mrf.mxu0
        %v469 = vadd.f32 0.0, %v468
        %v470 = vpop.f32.mrf.mxu0
        %471 = vmatprep.mubr.f32.mxu0 0.0
        %472 = vmatmul.mubr.f32.gmra.mxu0 %v270
        %v473 = vpop.f32.mrf.mxu0
        %v474 = vadd.f32 0.0, %v473
        %v475 = vpop.f32.mrf.mxu0
        %476 = vmatprep.mubr.f32.mxu0 0.0
        %477 = vmatmul.mubr.f32.gmra.mxu0 %v273
        %v478 = vpop.f32.mrf.mxu0
        %v479 = vadd.f32 0.0, %v478
        %v480 = vpop.f32.mrf.mxu0
        %481 = vmatprep.mubr.f32.mxu0 0.0
        %482 = vmatmul.mubr.f32.gmra.mxu0 %v276
        %v483 = vpop.f32.mrf.mxu0
        %v484 = vadd.f32 0.0, %v483
        %v485 = vpop.f32.mrf.mxu0
        %486 = vmatprep.mubr.f32.mxu0 0.0
        %487 = vmatmul.mubr.f32.gmra.mxu0 %v279
        %v488 = vpop.f32.mrf.mxu0
        %v489 = vadd.f32 0.0, %v488
        %v490 = vpop.f32.mrf.mxu0
        %491 = vmatprep.mubr.f32.mxu0 0.0
        %492 = vmatmul.mubr.f32.gmra.mxu0 %v282
        %v493 = vpop.f32.mrf.mxu0
        %v494 = vadd.f32 0.0, %v493
        %v495 = vpop.f32.mrf.mxu0
        %496 = vmatprep.mubr.f32.mxu0 0.0
        %497 = vmatmul.mubr.f32.gmra.mxu0 %v285
        %v498 = vpop.f32.mrf.mxu0
        %v499 = vadd.f32 0.0, %v498
        %v500 = vpop.f32.mrf.mxu0
        %501 = vmatprep.mubr.f32.mxu0 0.0
        %502 = vmatmul.mubr.f32.gmra.mxu0 %v288
        %v503 = vpop.f32.mrf.mxu0
        %v504 = vadd.f32 0.0, %v503
        %v505 = vpop.f32.mrf.mxu0
        %506 = vmatprep.mubr.f32.mxu0 0.0
        %507 = vmatmul.mubr.f32.gmra.mxu0 %v291
        %v508 = vpop.f32.mrf.mxu0
        %v509 = vadd.f32 0.0, %v508
        %v510 = vpop.f32.mrf.mxu0
        %511 = vmatprep.mubr.f32.mxu0 0.0
        %512 = vmatmul.mubr.f32.gmra.mxu0 %v294
        %v513 = vpop.f32.mrf.mxu0
        %v514 = vadd.f32 0.0, %v513
        %v515 = vpop.f32.mrf.mxu0
        %516 = vmatprep.mubr.f32.mxu0 0.0
        %517 = vmatmul.mubr.f32.gmra.mxu0 %v297
        %v518 = vpop.f32.mrf.mxu0
        %v519 = vadd.f32 0.0, %v518
        %v520 = vpop.f32.mrf.mxu0
        %521 = vmatprep.mubr.f32.mxu0 0.0
        %522 = vmatmul.mubr.f32.gmra.mxu0 %v300
        %v523 = vpop.f32.mrf.mxu0
        %v524 = vadd.f32 0.0, %v523
        %v525 = vpop.f32.mrf.mxu0
        %526 = vdwg.mxu0
        %v527 = vmul.f32 %v369, 0.5
        %v528 = vmul.f32 %v374, 0.5
        %v529 = vmul.f32 %v379, 0.5
        %v530 = vmul.f32 %v384, 0.5
        %v531 = vmul.f32 %v389, 0.5
        %v532 = vmul.f32 %v394, 0.5
        %v533 = vmul.f32 %v399, 0.5
        %v534 = vmul.f32 %v404, 0.5
        %v535 = vmul.f32 %v409, 0.5
        %v536 = vmul.f32 %v414, 0.5
        %v537 = vmul.f32 %v419, 0.5
        %v538 = vmul.f32 %v424, 0.5
        %v539 = vmul.f32 %v429, 0.5
        %v540 = vmul.f32 %v434, 0.5
        %v541 = vmul.f32 %v439, 0.5
        %v542 = vmul.f32 %v444, 0.5
        %v543 = vmul.f32 %v449, 0.5
        %v544 = vmul.f32 %v454, 0.5
        %v545 = vmul.f32 %v459, 0.5
        %v546 = vmul.f32 %v464, 0.5
        %v547 = vmul.f32 %v469, 0.5
        %v548 = vmul.f32 %v474, 0.5
        %v549 = vmul.f32 %v479, 0.5
        %v550 = vmul.f32 %v484, 0.5
        %v551 = vmul.f32 %v489, 0.5
        %v552 = vmul.f32 %v494, 0.5
        %v553 = vmul.f32 %v499, 0.5
        %v554 = vmul.f32 %v504, 0.5
        %v555 = vmul.f32 %v509, 0.5
        %v556 = vmul.f32 %v514, 0.5
        %v557 = vmul.f32 %v519, 0.5
        %v558 = vmul.f32 %v524, 0.5
        %v559 = vtanh.pop %v527
        %v560 = vtanh.pop %v528
        %v561 = vtanh.pop %v529
        %v562 = vtanh.pop %v530
        %v563 = vtanh.pop %v531
        %v564 = vtanh.pop %v532
        %v565 = vtanh.pop %v533
        %v566 = vtanh.pop %v534
        %v567 = vtanh.pop %v535
        %v568 = vtanh.pop %v536
        %v569 = vtanh.pop %v537
        %v570 = vtanh.pop %v538
        %v571 = vtanh.pop %v539
        %v572 = vtanh.pop %v540
        %v573 = vtanh.pop %v541
        %v574 = vtanh.pop %v542
        %v575 = vtanh.pop %v543
        %v576 = vtanh.pop %v544
        %v577 = vtanh.pop %v545
        %v578 = vtanh.pop %v546
        %v579 = vtanh.pop %v547
        %v580 = vtanh.pop %v548
        %v581 = vtanh.pop %v549
        %v582 = vtanh.pop %v550
        %v583 = vtanh.pop %v551
        %v584 = vtanh.pop %v552
        %v585 = vtanh.pop %v553
        %v586 = vtanh.pop %v554
        %v587 = vtanh.pop %v555
        %v588 = vtanh.pop %v556
        %v589 = vtanh.pop %v557
        %v590 = vtanh.pop %v558
        %v591 = vadd.f32 %v559, 1.0
        %v592 = vadd.f32 %v560, 1.0
        %v593 = vadd.f32 %v561, 1.0
        %v594 = vadd.f32 %v562, 1.0
        %v595 = vadd.f32 %v563, 1.0
        %v596 = vadd.f32 %v564, 1.0
        %v597 = vadd.f32 %v565, 1.0
        %v598 = vadd.f32 %v566, 1.0
        %v599 = vadd.f32 %v567, 1.0
        %v600 = vadd.f32 %v568, 1.0
        %v601 = vadd.f32 %v569, 1.0
        %v602 = vadd.f32 %v570, 1.0
        %v603 = vadd.f32 %v571, 1.0
        %v604 = vadd.f32 %v572, 1.0
        %v605 = vadd.f32 %v573, 1.0
        %v606 = vadd.f32 %v574, 1.0
        %v607 = vadd.f32 %v575, 1.0
        %v608 = vadd.f32 %v576, 1.0
        %v609 = vadd.f32 %v577, 1.0
        %v610 = vadd.f32 %v578, 1.0
        %v611 = vadd.f32 %v579, 1.0
        %v612 = vadd.f32 %v580, 1.0
        %v613 = vadd.f32 %v581, 1.0
        %v614 = vadd.f32 %v582, 1.0
        %v615 = vadd.f32 %v583, 1.0
        %v616 = vadd.f32 %v584, 1.0
        %v617 = vadd.f32 %v585, 1.0
        %v618 = vadd.f32 %v586, 1.0
        %v619 = vadd.f32 %v587, 1.0
        %v620 = vadd.f32 %v588, 1.0
        %v621 = vadd.f32 %v589, 1.0
        %v622 = vadd.f32 %v590, 1.0
        %v623 = vmul.f32 %v591, 0.5
        %v624 = vmul.f32 %v592, 0.5
        %v625 = vmul.f32 %v593, 0.5
        %v626 = vmul.f32 %v594, 0.5
        %v627 = vmul.f32 %v595, 0.5
        %v628 = vmul.f32 %v596, 0.5
        %v629 = vmul.f32 %v597, 0.5
        %v630 = vmul.f32 %v598, 0.5
        %v631 = vmul.f32 %v599, 0.5
        %v632 = vmul.f32 %v600, 0.5
        %v633 = vmul.f32 %v601, 0.5
        %v634 = vmul.f32 %v602, 0.5
        %v635 = vmul.f32 %v603, 0.5
        %v636 = vmul.f32 %v604, 0.5
        %v637 = vmul.f32 %v605, 0.5
        %v638 = vmul.f32 %v606, 0.5
        %v639 = vmul.f32 %v607, 0.5
        %v640 = vmul.f32 %v608, 0.5
        %v641 = vmul.f32 %v609, 0.5
        %v642 = vmul.f32 %v610, 0.5
        %v643 = vmul.f32 %v611, 0.5
        %v644 = vmul.f32 %v612, 0.5
        %v645 = vmul.f32 %v613, 0.5
        %v646 = vmul.f32 %v614, 0.5
        %v647 = vmul.f32 %v615, 0.5
        %v648 = vmul.f32 %v616, 0.5
        %v649 = vmul.f32 %v617, 0.5
        %v650 = vmul.f32 %v618, 0.5
        %v651 = vmul.f32 %v619, 0.5
        %v652 = vmul.f32 %v620, 0.5
        %v653 = vmul.f32 %v621, 0.5
        %v654 = vmul.f32 %v622, 0.5
        %v655 = vld [vmem:[%s2] sm:$0xff]
        %v656 = vld [vmem:[%s2 + $0x8] sm:$0xff]
        %v657 = vld [vmem:[%s2 + $0x10] sm:$0xff]
        %v658 = vld [vmem:[%s2 + $0x18] sm:$0xff]
        %v659 = vld [vmem:[%s2 + $0x20] sm:$0xff]
        %v660 = vld [vmem:[%s2 + $0x28] sm:$0xff]
        %v661 = vld [vmem:[%s2 + $0x30] sm:$0xff]
        %v662 = vld [vmem:[%s2 + $0x38] sm:$0xff]
        %v663 = vld [vmem:[%s2 + $0x40] sm:$0xff]
        %v664 = vld [vmem:[%s2 + $0x48] sm:$0xff]
        %v665 = vld [vmem:[%s2 + $0x50] sm:$0xff]
        %v666 = vld [vmem:[%s2 + $0x58] sm:$0xff]
        %v667 = vld [vmem:[%s2 + $0x60] sm:$0xff]
        %v668 = vld [vmem:[%s2 + $0x68] sm:$0xff]
        %v669 = vld [vmem:[%s2 + $0x70] sm:$0xff]
        %v670 = vld [vmem:[%s2 + $0x78] sm:$0xff]
        %671 = vmatprep.subr.mxu0 0.0
        %672 = vmatpush1.msra.mxu0 %v670
        %673 = vmatprep.subr.mxu0 0.0
        %674 = vmatpush1.msra.mxu0 %v669
        %675 = vmatprep.subr.mxu0 0.0
        %676 = vmatpush1.msra.mxu0 %v668
        %677 = vmatprep.subr.mxu0 0.0
        %678 = vmatpush1.msra.mxu0 %v667
        %679 = vmatprep.subr.mxu0 0.0
        %680 = vmatpush1.msra.mxu0 %v666
        %681 = vmatprep.subr.mxu0 0.0
        %682 = vmatpush1.msra.mxu0 %v665
        %683 = vmatprep.subr.mxu0 0.0
        %684 = vmatpush1.msra.mxu0 %v664
        %685 = vmatprep.subr.mxu0 0.0
        %686 = vmatpush1.msra.mxu0 %v663
        %687 = vmatprep.subr.mxu0 0.0
        %688 = vmatpush1.msra.mxu0 %v662
        %689 = vmatprep.subr.mxu0 0.0
        %690 = vmatpush1.msra.mxu0 %v661
        %691 = vmatprep.subr.mxu0 0.0
        %692 = vmatpush1.msra.mxu0 %v660
        %693 = vmatprep.subr.mxu0 0.0
        %694 = vmatpush1.msra.mxu0 %v659
        %695 = vmatprep.subr.mxu0 0.0
        %696 = vmatpush1.msra.mxu0 %v658
        %697 = vmatprep.subr.mxu0 0.0
        %698 = vmatpush1.msra.mxu0 %v657
        %699 = vmatprep.subr.mxu0 0.0
        %700 = vmatpush1.msra.mxu0 %v656
        %701 = vmatprep.subr.mxu0 0.0
        %702 = vmatpush1.msra.mxu0 %v655
        %703 = vmatprep.subr.mxu0 0.0
        %704 = vmatpush2.msra.mxu0 0.0
        %705 = vmatprep.subr.mxu0 0.0
        %706 = vmatpush2.msra.mxu0 0.0
        %707 = vmatprep.subr.mxu0 0.0
        %708 = vmatpush2.msra.mxu0 0.0
        %709 = vmatprep.subr.mxu0 0.0
        %710 = vmatpush2.msra.mxu0 0.0
        %711 = vmatprep.subr.mxu0 0.0
        %712 = vmatpush2.msra.mxu0 0.0
        %713 = vmatprep.subr.mxu0 0.0
        %714 = vmatpush2.msra.mxu0 0.0
        %715 = vmatprep.subr.mxu0 0.0
        %716 = vmatpush2.msra.mxu0 0.0
        %717 = vmatprep.subr.mxu0 0.0
        %718 = vmatpush2.msra.mxu0 0.0
        %719 = vmatprep.subr.mxu0 0.0
        %720 = vmatpush2.msra.mxu0 0.0
        %721 = vmatprep.subr.mxu0 0.0
        %722 = vmatpush2.msra.mxu0 0.0
        %723 = vmatprep.subr.mxu0 0.0
        %724 = vmatpush2.msra.mxu0 0.0
        %725 = vmatprep.subr.mxu0 0.0
        %726 = vmatpush2.msra.mxu0 0.0
        %727 = vmatprep.subr.mxu0 0.0
        %728 = vmatpush2.msra.mxu0 0.0
        %729 = vmatprep.subr.mxu0 0.0
        %730 = vmatpush2.msra.mxu0 0.0
        %731 = vmatprep.subr.mxu0 0.0
        %732 = vmatpush2.msra.mxu0 0.0
        %733 = vmatprep.subr.mxu0 0.0
        %734 = vmatpush2.msra.mxu0 0.0
        %735 = vmatprep.mubr.f32.mxu0 0.0
        %736 = vmatmul.mubr.f32.gmra.mxu0 %v623
        %v737 = vpop.f32.mrf.mxu0
        %v738 = vadd.f32 0.0, %v737
        %v739 = vpop.f32.mrf.mxu0
        %740 = vmatprep.mubr.f32.mxu0 0.0
        %741 = vmatmul.mubr.f32.gmra.mxu0 %v624
        %v742 = vpop.f32.mrf.mxu0
        %v743 = vadd.f32 0.0, %v742
        %v744 = vpop.f32.mrf.mxu0
        %745 = vmatprep.mubr.f32.mxu0 0.0
        %746 = vmatmul.mubr.f32.gmra.mxu0 %v625
        %v747 = vpop.f32.mrf.mxu0
        %v748 = vadd.f32 0.0, %v747
        %v749 = vpop.f32.mrf.mxu0
        %750 = vmatprep.mubr.f32.mxu0 0.0
        %751 = vmatmul.mubr.f32.gmra.mxu0 %v626
        %v752 = vpop.f32.mrf.mxu0
        %v753 = vadd.f32 0.0, %v752
        %v754 = vpop.f32.mrf.mxu0
        %755 = vmatprep.mubr.f32.mxu0 0.0
        %756 = vmatmul.mubr.f32.gmra.mxu0 %v627
        %v757 = vpop.f32.mrf.mxu0
        %v758 = vadd.f32 0.0, %v757
        %v759 = vpop.f32.mrf.mxu0
        %760 = vmatprep.mubr.f32.mxu0 0.0
        %761 = vmatmul.mubr.f32.gmra.mxu0 %v628
        %v762 = vpop.f32.mrf.mxu0
        %v763 = vadd.f32 0.0, %v762
        %v764 = vpop.f32.mrf.mxu0
        %765 = vmatprep.mubr.f32.mxu0 0.0
        %766 = vmatmul.mubr.f32.gmra.mxu0 %v629
        %v767 = vpop.f32.mrf.mxu0
        %v768 = vadd.f32 0.0, %v767
        %v769 = vpop.f32.mrf.mxu0
        %770 = vmatprep.mubr.f32.mxu0 0.0
        %771 = vmatmul.mubr.f32.gmra.mxu0 %v630
        %v772 = vpop.f32.mrf.mxu0
        %v773 = vadd.f32 0.0, %v772
        %v774 = vpop.f32.mrf.mxu0
        %775 = vmatprep.mubr.f32.mxu0 0.0
        %776 = vmatmul.mubr.f32.gmra.mxu0 %v631
        %v777 = vpop.f32.mrf.mxu0
        %v778 = vadd.f32 0.0, %v777
        %v779 = vpop.f32.mrf.mxu0
        %780 = vmatprep.mubr.f32.mxu0 0.0
        %781 = vmatmul.mubr.f32.gmra.mxu0 %v632
        %v782 = vpop.f32.mrf.mxu0
        %v783 = vadd.f32 0.0, %v782
        %v784 = vpop.f32.mrf.mxu0
        %785 = vmatprep.mubr.f32.mxu0 0.0
        %786 = vmatmul.mubr.f32.gmra.mxu0 %v633
        %v787 = vpop.f32.mrf.mxu0
        %v788 = vadd.f32 0.0, %v787
        %v789 = vpop.f32.mrf.mxu0
        %790 = vmatprep.mubr.f32.mxu0 0.0
        %791 = vmatmul.mubr.f32.gmra.mxu0 %v634
        %v792 = vpop.f32.mrf.mxu0
        %v793 = vadd.f32 0.0, %v792
        %v794 = vpop.f32.mrf.mxu0
        %795 = vmatprep.mubr.f32.mxu0 0.0
        %796 = vmatmul.mubr.f32.gmra.mxu0 %v635
        %v797 = vpop.f32.mrf.mxu0
        %v798 = vadd.f32 0.0, %v797
        %v799 = vpop.f32.mrf.mxu0
        %800 = vmatprep.mubr.f32.mxu0 0.0
        %801 = vmatmul.mubr.f32.gmra.mxu0 %v636
        %v802 = vpop.f32.mrf.mxu0
        %v803 = vadd.f32 0.0, %v802
        %v804 = vpop.f32.mrf.mxu0
        %805 = vmatprep.mubr.f32.mxu0 0.0
        %806 = vmatmul.mubr.f32.gmra.mxu0 %v637
        %v807 = vpop.f32.mrf.mxu0
        %v808 = vadd.f32 0.0, %v807
        %v809 = vpop.f32.mrf.mxu0
        %810 = vmatprep.mubr.f32.mxu0 0.0
        %811 = vmatmul.mubr.f32.gmra.mxu0 %v638
        %v812 = vpop.f32.mrf.mxu0
        %v813 = vadd.f32 0.0, %v812
        %v814 = vpop.f32.mrf.mxu0
        %815 = vmatprep.mubr.f32.mxu0 0.0
        %816 = vmatmul.mubr.f32.gmra.mxu0 %v639
        %v817 = vpop.f32.mrf.mxu0
        %v818 = vadd.f32 0.0, %v817
        %v819 = vpop.f32.mrf.mxu0
        %820 = vmatprep.mubr.f32.mxu0 0.0
        %821 = vmatmul.mubr.f32.gmra.mxu0 %v640
        %v822 = vpop.f32.mrf.mxu0
        %v823 = vadd.f32 0.0, %v822
        %v824 = vpop.f32.mrf.mxu0
        %825 = vmatprep.mubr.f32.mxu0 0.0
        %826 = vmatmul.mubr.f32.gmra.mxu0 %v641
        %v827 = vpop.f32.mrf.mxu0
        %v828 = vadd.f32 0.0, %v827
        %v829 = vpop.f32.mrf.mxu0
        %830 = vmatprep.mubr.f32.mxu0 0.0
        %831 = vmatmul.mubr.f32.gmra.mxu0 %v642
        %v832 = vpop.f32.mrf.mxu0
        %v833 = vadd.f32 0.0, %v832
        %v834 = vpop.f32.mrf.mxu0
        %835 = vmatprep.mubr.f32.mxu0 0.0
        %836 = vmatmul.mubr.f32.gmra.mxu0 %v643
        %v837 = vpop.f32.mrf.mxu0
        %v838 = vadd.f32 0.0, %v837
        %v839 = vpop.f32.mrf.mxu0
        %840 = vmatprep.mubr.f32.mxu0 0.0
        %841 = vmatmul.mubr.f32.gmra.mxu0 %v644
        %v842 = vpop.f32.mrf.mxu0
        %v843 = vadd.f32 0.0, %v842
        %v844 = vpop.f32.mrf.mxu0
        %845 = vmatprep.mubr.f32.mxu0 0.0
        %846 = vmatmul.mubr.f32.gmra.mxu0 %v645
        %v847 = vpop.f32.mrf.mxu0
        %v848 = vadd.f32 0.0, %v847
        %v849 = vpop.f32.mrf.mxu0
        %850 = vmatprep.mubr.f32.mxu0 0.0
        %851 = vmatmul.mubr.f32.gmra.mxu0 %v646
        %v852 = vpop.f32.mrf.mxu0
        %v853 = vadd.f32 0.0, %v852
        %v854 = vpop.f32.mrf.mxu0
        %855 = vmatprep.mubr.f32.mxu0 0.0
        %856 = vmatmul.mubr.f32.gmra.mxu0 %v647
        %v857 = vpop.f32.mrf.mxu0
        %v858 = vadd.f32 0.0, %v857
        %v859 = vpop.f32.mrf.mxu0
        %860 = vmatprep.mubr.f32.mxu0 0.0
        %861 = vmatmul.mubr.f32.gmra.mxu0 %v648
        %v862 = vpop.f32.mrf.mxu0
        %v863 = vadd.f32 0.0, %v862
        %v864 = vpop.f32.mrf.mxu0
        %865 = vmatprep.mubr.f32.mxu0 0.0
        %866 = vmatmul.mubr.f32.gmra.mxu0 %v649
        %v867 = vpop.f32.mrf.mxu0
        %v868 = vadd.f32 0.0, %v867
        %v869 = vpop.f32.mrf.mxu0
        %870 = vmatprep.mubr.f32.mxu0 0.0
        %871 = vmatmul.mubr.f32.gmra.mxu0 %v650
        %v872 = vpop.f32.mrf.mxu0
        %v873 = vadd.f32 0.0, %v872
        %v874 = vpop.f32.mrf.mxu0
        %875 = vmatprep.mubr.f32.mxu0 0.0
        %876 = vmatmul.mubr.f32.gmra.mxu0 %v651
        %v877 = vpop.f32.mrf.mxu0
        %v878 = vadd.f32 0.0, %v877
        %v879 = vpop.f32.mrf.mxu0
        %880 = vmatprep.mubr.f32.mxu0 0.0
        %881 = vmatmul.mubr.f32.gmra.mxu0 %v652
        %v882 = vpop.f32.mrf.mxu0
        %v883 = vadd.f32 0.0, %v882
        %v884 = vpop.f32.mrf.mxu0
        %885 = vmatprep.mubr.f32.mxu0 0.0
        %886 = vmatmul.mubr.f32.gmra.mxu0 %v653
        %v887 = vpop.f32.mrf.mxu0
        %v888 = vadd.f32 0.0, %v887
        %v889 = vpop.f32.mrf.mxu0
        %890 = vmatprep.mubr.f32.mxu0 0.0
        %891 = vmatmul.mubr.f32.gmra.mxu0 %v654
        %v892 = vpop.f32.mrf.mxu0
        %v893 = vadd.f32 0.0, %v892
        %v894 = vpop.f32.mrf.mxu0
        %895 = vdwg.mxu0
        %896 = vst [vmem:[%s164] sm:$0xff] %v738
        %897 = vst [vmem:[%s164 + $0x8] sm:$0xff] %v743
        %898 = vst [vmem:[%s164 + $0x10] sm:$0xff] %v748
        %899 = vst [vmem:[%s164 + $0x18] sm:$0xff] %v753
        %900 = vst [vmem:[%s164 + $0x20] sm:$0xff] %v758
        %901 = vst [vmem:[%s164 + $0x28] sm:$0xff] %v763
        %902 = vst [vmem:[%s164 + $0x30] sm:$0xff] %v768
        %903 = vst [vmem:[%s164 + $0x38] sm:$0xff] %v773
        %904 = vst [vmem:[%s164 + $0x40] sm:$0xff] %v778
        %905 = vst [vmem:[%s164 + $0x48] sm:$0xff] %v783
        %906 = vst [vmem:[%s164 + $0x50] sm:$0xff] %v788
        %907 = vst [vmem:[%s164 + $0x58] sm:$0xff] %v793
        %908 = vst [vmem:[%s164 + $0x60] sm:$0xff] %v798
        %909 = vst [vmem:[%s164 + $0x68] sm:$0xff] %v803
        %910 = vst [vmem:[%s164 + $0x70] sm:$0xff] %v808
        %911 = vst [vmem:[%s164 + $0x78] sm:$0xff] %v813
        %912 = vst [vmem:[%s164 + $0x80] sm:$0xff] %v818
        %913 = vst [vmem:[%s164 + $0x88] sm:$0xff] %v823
        %914 = vst [vmem:[%s164 + $0x90] sm:$0xff] %v828
        %915 = vst [vmem:[%s164 + $0x98] sm:$0xff] %v833
        %916 = vst [vmem:[%s164 + $0xa0] sm:$0xff] %v838
        %917 = vst [vmem:[%s164 + $0xa8] sm:$0xff] %v843
        %918 = vst [vmem:[%s164 + $0xb0] sm:$0xff] %v848
        %919 = vst [vmem:[%s164 + $0xb8] sm:$0xff] %v853
        %920 = vst [vmem:[%s164 + $0xc0] sm:$0xff] %v858
        %921 = vst [vmem:[%s164 + $0xc8] sm:$0xff] %v863
        %922 = vst [vmem:[%s164 + $0xd0] sm:$0xff] %v868
        %923 = vst [vmem:[%s164 + $0xd8] sm:$0xff] %v873
        %924 = vst [vmem:[%s164 + $0xe0] sm:$0xff] %v878
        %925 = vst [vmem:[%s164 + $0xe8] sm:$0xff] %v883
        %926 = vst [vmem:[%s164 + $0xf0] sm:$0xff] %v888
        %927 = vst [vmem:[%s164 + $0xf8] sm:$0xff] %v893
        %s928 = sand.u32 %s93, 1
        %s929 = scalar_lea.sflag [#allocation3], %s928
        %s930 = sand.u32 %s93, 1
        %s931 = smul.addr %s930, 256
        %s932 = scalar_lea.vmem [#allocation2], %s931
        // Predicated region
        $region33: #{tpu_custom_call.1} parent=31 // pred_check
          %p933 = pneg %p103
        $region34: #{tpu_custom_call.1} parent=31 // pred_check_branch
          %935 = sbr.rel (%p933) target = $region36
        $region35: #{tpu_custom_call.1} parent=31 // pred_region
          %s936 = smul.u32 32, %s17
          %s938 = ssub.s32 4096, 4096
          %939 = vsyncadd %s929, %s938
          %s940 = smul.addr %s936, 128
          %s941 = scalar_lea.hbm %s3, %s940
          %s942 = sshll.u32 %s932, 4
          %s943 = int_to_ptr.vmem [resolvable:$true] %s942
          %948 = dma.vmem_to_hbm [thread:$0]  %s943, 4096, %s941, %s929, 128, 128, 8
        $region36: #{tpu_custom_call.1} parent=31 // pred_fallthru
          _
      $region32: #{tpu_custom_call.1} parent=5 // pred_fallthru
        _
      %p949 = scmp.le.s32.totalorder 2, %s12
      // Predicated region
      $region37: #{tpu_custom_call.1} parent=5 // pred_check
        %p950 = pneg %p949
      $region38: #{tpu_custom_call.1} parent=5 // pred_check_branch
        %952 = sbr.rel (%p950) target = $region40
      $region39: #{tpu_custom_call.1} parent=5 // pred_region
        %s953 = ssub.s32 %s12, 2
        // Predicated region
        $region41: #{tpu_custom_call.1} parent=39 // pred_check
          %p954 = pneg %p109
        $region42: #{tpu_custom_call.1} parent=39 // pred_check_branch
          %956 = sbr.rel (%p954) target = $region44
        $region43: #{tpu_custom_call.1} parent=39 // pred_region
          %s957 = sand.u32 %s94, 1
          %s958 = scalar_lea.sflag [#allocation3], %s957
          %s959 = sand.u32 %s94, 1
          %s960 = smul.addr %s959, 256
          %s961 = scalar_lea.vmem [#allocation2], %s960
          %962 = dma.done %s958, 4096
        $region44: #{tpu_custom_call.1} parent=39 // pred_fallthru
          _
      $region40: #{tpu_custom_call.1} parent=5 // pred_fallthru
        _
    $region6: #{tpu_custom_call.1} parent=1 // loop_footer
      %s16 = sadd.s32 1, %s12
    $region7: #{tpu_custom_call.1} parent=1 // loop_footer_branch
      %11 = sbr.rel target = $region3
    $region8: #{tpu_custom_call.1} parent=1 // loop_exit
      _
    %963 = vsyncpa [#allocation3], 1
    %s964 = scalar_lea.sflag [#allocation3], 1
    %965 = vsyncpa %s964, 1

</llo_original>
